<compile_context>
chip_gen: v5e
topology: v5e:2x2
jax: 0.10.0
libtpu: 0.0.40
codegen_flags: <defaults>
</compile_context>

<pallas_src>
import functools

import jax
import jax.numpy as jnp
from jax import lax
from jax.experimental import pallas as pl
from jax.experimental.pallas import tpu as pltpu


def _make_kernel(B, N, beta, dt, dx, chunk, unroll):
    r = dt / dx
    c = beta / 12.0

    def kernel(init_ref, traj_ref, state_ref):
        ci = pl.program_id(0)

        @pl.when(ci == 0)
        def _():
            state_ref[...] = init_ref[...]

        # Hoisted once per chunk (JAX does not CSE broadcast_in_dim inside the loop).
        col = lax.broadcasted_iota(jnp.int32, (B, N), 1)
        is_left = col == 0
        is_right = col == N - 1

        def advance(u):
            u2 = u * u
            # f(u) = 1.5u - 0.5u^3 + c*(0.75u^2 - 2u^3 + 1.5u^4 - 0.25u^6)   (Horner, shared u2)
            f = u * (1.5 - 0.5 * u2) + (c * u2) * (
                0.75 + u * (-2.0 + u * (1.5 - 0.25 * u2)))
            # |f'(u)| = |1.5(1 - u^2) + c*(1.5u - 6u^2 + 6u^3 - 1.5u^5)|     (Horner)
            a = jnp.abs(1.5 * (1.0 - u2)
                        + c * (u * (1.5 + u * (-6.0 + u * (6.0 - 1.5 * u2)))))

            # Neighbor (j+1) values via lane rotation; pltpu.roll requires a non-negative
            # shift, so a left-rotate-by-1 is expressed as roll by N-1.
            u_r = pltpu.roll(u, shift=N - 1, axis=1)
            f_r = pltpu.roll(f, shift=N - 1, axis=1)
            a_r = pltpu.roll(a, shift=N - 1, axis=1)

            # f_half[j] valid for j = 0..N-2 (j = N-1 wraps -> garbage, never used).
            f_half = 0.5 * (f + f_r) - 0.5 * jnp.maximum(a, a_r) * (u_r - u)
            f_half_l = pltpu.roll(f_half, shift=1, axis=1)   # f_half[j-1]

            # Interior update, valid for j = 1..N-2.
            upd = u - r * (f_half - f_half_l)

            # Boundaries: u[0] = u[1], u[N-1] = u[N-2]  (wrapped garbage lanes overwritten).
            left = pltpu.roll(upd, shift=N - 1, axis=1)      # at col 0     -> upd[:, 1]
            right = pltpu.roll(upd, shift=1, axis=1)         # at col N - 1 -> upd[:, N-2]
            return jnp.where(is_left, left, jnp.where(is_right, right, upd))

        def body(t, u):
            traj_ref[t] = u          # state after (ci*chunk + t) steps; t=0 of chunk 0 -> init
            return advance(u)        # then advance one step

        u_final = lax.fori_loop(0, chunk, body, state_ref[...], unroll=unroll)
        state_ref[...] = u_final     # carry state to the next chunk (one store per chunk)

    return kernel


@functools.partial(jax.jit, static_argnames=("stepnum", "beta", "dt", "dx", "chunk"))
def variant_coe_linear1d_forward(init, stepnum, beta, dt, dx, chunk=None):
    """init: (batch, N) f32 -> trajectories: (stepnum, batch, N) f32."""
    B, N = init.shape
    init = init.astype(jnp.float32)

    if chunk is None:
        # Keep the double-buffered (T, B, N) output block <= ~8 MiB total so it fits the
        # default scoped VMEM limit on every generation (incl. v7x's 64 MiB physical VMEM).
        bytes_per_step = B * N * 4
        T = max(1, min(stepnum, (4 * 1024 * 1024) // bytes_per_step, 1024))
    else:
        T = max(1, min(int(chunk), stepnum))

    num_chunks = pl.cdiv(stepnum, T)
    padded_steps = num_chunks * T
    unroll = True if T <= 16 else 8

    kernel = _make_kernel(B, N, float(beta), float(dt), float(dx), T, unroll)

    traj = pl.pallas_call(
        kernel,
        out_shape=jax.ShapeDtypeStruct((padded_steps, B, N), jnp.float32),
        grid_spec=pltpu.PrefetchScalarGridSpec(
            num_scalar_prefetch=0,
            grid=(num_chunks,),
            # init: constant index_map -> stays resident, DMA'd exactly once.
            in_specs=[pl.BlockSpec((B, N), lambda i: (0, 0))],
            out_specs=pl.BlockSpec((T, B, N), lambda i: (i, 0, 0)),
            scratch_shapes=[pltpu.VMEM((B, N), jnp.float32)],
        ),
        compiler_params=pltpu.CompilerParams(
            dimension_semantics=("arbitrary",),  # time steps are inherently sequential
        ),
    )(init)

    if padded_steps != stepnum:
        traj = traj[:stepnum]
    return traj


def _reference(init, stepnum, beta, dt, dx):
    """Pure-JAX reference mirroring the PyTorch forward (is_real analytic flux)."""
    c = beta / 12.0
    r = dt / dx
    u = init
    traj = [u]
    for _ in range(1, stepnum):
        u2 = u * u
        f = 0.5 * u * (3.0 - u2) + c * u2 * (0.75 - 2.0 * u + 1.5 * u2 - 0.25 * u2 * u2)
        dfdu = jnp.abs(1.5 * (1.0 - u2)
                       + c * (1.5 * u - 6.0 * u2 + 6.0 * u2 * u - 1.5 * u2 * u2 * u))
        a = jnp.maximum(dfdu[:, :-1], dfdu[:, 1:])
        fh = 0.5 * (f[:, :-1] + f[:, 1:]) - 0.5 * a * (u[:, 1:] - u[:, :-1])
        interior = u[:, 1:-1] - r * (fh[:, 1:] - fh[:, :-1])
        u = jnp.concatenate([interior[:, :1], interior, interior[:, -1:]], axis=1)
        traj.append(u)
    return jnp.stack(traj)


if __name__ == "__main__":
    # Deterministic small-shape setup consistent with the module's forward:
    # batch_size=2, N=16 spatial cells, stepnum=8 time steps.
    B, N, stepnum = 2, 16, 8
    beta, dt, dx = 0.5, 0.01, 0.1

    key = jax.random.PRNGKey(0)
    init = jax.random.uniform(key, (B, N), dtype=jnp.float32)  # u0 in [0, 1)

    traj = variant_coe_linear1d_forward(init, stepnum, beta, dt, dx)
    traj = jax.block_until_ready(traj)

    ref = _reference(init, stepnum, beta, dt, dx)
    assert traj.shape == (stepnum, B, N)
    assert jnp.allclose(traj, ref, atol=1e-5, rtol=1e-5), "mismatch vs pure-JAX reference"

    # TODO(synk): is_train=True path (f_predict via self.polys) is not implementable —
    # `self.polys` is never defined in __init__; only the is_real analytic-flux path is
    # reproduced. For production batch sizes (B >= 128), transpose the working layout to
    # (N, B) so batch is lane-dense, and add a "parallel" batch grid axis to use both v7x
    # TensorCores.
    print("KERNEL_OK")
</pallas_src>

<mosaic_0001>
module attributes {stable_mosaic.version = 11 : i64} {
  func.func @kernel(%arg0: i32, %arg1: memref<2x16xf32, #tpu.memory_space<vmem>>, %arg2: memref<8x2x16xf32, #tpu.memory_space<vmem>>, %arg3: memref<2x16xf32, #tpu.memory_space<vmem>>) attributes {dimension_semantics = [#tpu.dimension_semantics<arbitrary>], iteration_bounds = array<i64: 1>, scalar_prefetch = 0 : i64, scratch_operands = 1 : i64, tpu.core_type = #tpu.core_type<tc>, window_params = [{pipeline_mode = #tpu.pipeline_mode<synchronous>, transform_indices = @transform_0, window_bounds = array<i64: 2, 16>}, {transform_indices = @transform_1, window_bounds = array<i64: 8, 2, 16>}]} {
    %c0_i32 = arith.constant 0 : i32
    %0 = arith.cmpi eq, %arg0, %c0_i32 : i32
    %1 = arith.extui %0 : i1 to i32
    %c0_i32_0 = arith.constant 0 : i32
    %2 = arith.cmpi ne, %1, %c0_i32_0 : i32
    scf.if %2 {
      %c0_205 = arith.constant 0 : index
      %c0_206 = arith.constant 0 : index
      %522 = vector.load %arg1[%c0_205, %c0_206] : memref<2x16xf32, #tpu.memory_space<vmem>>, vector<2x16xf32>
      %c0_207 = arith.constant 0 : index
      %c0_208 = arith.constant 0 : index
      %523 = vector.load %arg3[%c0_207, %c0_208] : memref<2x16xf32, #tpu.memory_space<vmem>>, vector<2x16xf32>
      tpu.vector_store %arg3[%c0_207, %c0_208], %522 {strides = array<i32>} : memref<2x16xf32, #tpu.memory_space<vmem>>, vector<2x16xf32>,
    } else {
    }
    %3 = tpu.iota {dimensions = array<i32: 1>} : vector<2x16xi32>
    %c0_i32_1 = arith.constant 0 : i32
    %4 = vector.broadcast %c0_i32_1 : i32 to vector<2x16xi32>
    %5 = arith.cmpi eq, %3, %4 : vector<2x16xi32>
    %c15_i32 = arith.constant 15 : i32
    %6 = vector.broadcast %c15_i32 : i32 to vector<2x16xi32>
    %7 = arith.cmpi eq, %3, %6 : vector<2x16xi32>
    %c0 = arith.constant 0 : index
    %c0_2 = arith.constant 0 : index
    %8 = vector.load %arg3[%c0, %c0_2] : memref<2x16xf32, #tpu.memory_space<vmem>>, vector<2x16xf32>
    %c0_i32_3 = arith.constant 0 : i32
    %9 = arith.index_cast %c0_i32_3 : i32 to index
    %c0_4 = arith.constant 0 : index
    %c0_5 = arith.constant 0 : index
    %10 = vector.load %arg2[%9, %c0_4, %c0_5] : memref<8x2x16xf32, #tpu.memory_space<vmem>>, vector<1x2x16xf32>
    %11 = vector.shape_cast %10 : vector<1x2x16xf32> to vector<2x16xf32>
    %12 = vector.shape_cast %8 : vector<2x16xf32> to vector<1x2x16xf32>
    tpu.vector_store %arg2[%9, %c0_4, %c0_5], %12 {strides = array<i32>} : memref<8x2x16xf32, #tpu.memory_space<vmem>>, vector<1x2x16xf32>,
    %13 = arith.mulf %8, %8 : vector<2x16xf32>
    %cst = arith.constant 5.000000e-01 : f32
    %14 = vector.broadcast %cst : f32 to vector<2x16xf32>
    %15 = arith.mulf %14, %13 : vector<2x16xf32>
    %cst_6 = arith.constant 1.500000e+00 : f32
    %16 = vector.broadcast %cst_6 : f32 to vector<2x16xf32>
    %17 = arith.subf %16, %15 : vector<2x16xf32>
    %18 = arith.mulf %8, %17 : vector<2x16xf32>
    %cst_7 = arith.constant 0.0416666679 : f32
    %19 = vector.broadcast %cst_7 : f32 to vector<2x16xf32>
    %20 = arith.mulf %19, %13 : vector<2x16xf32>
    %cst_8 = arith.constant 2.500000e-01 : f32
    %21 = vector.broadcast %cst_8 : f32 to vector<2x16xf32>
    %22 = arith.mulf %21, %13 : vector<2x16xf32>
    %cst_9 = arith.constant 1.500000e+00 : f32
    %23 = vector.broadcast %cst_9 : f32 to vector<2x16xf32>
    %24 = arith.subf %23, %22 : vector<2x16xf32>
    %25 = arith.mulf %8, %24 : vector<2x16xf32>
    %cst_10 = arith.constant -2.000000e+00 : f32
    %26 = vector.broadcast %cst_10 : f32 to vector<2x16xf32>
    %27 = arith.addf %26, %25 : vector<2x16xf32>
    %28 = arith.mulf %8, %27 : vector<2x16xf32>
    %cst_11 = arith.constant 7.500000e-01 : f32
    %29 = vector.broadcast %cst_11 : f32 to vector<2x16xf32>
    %30 = arith.addf %29, %28 : vector<2x16xf32>
    %31 = arith.mulf %20, %30 : vector<2x16xf32>
    %32 = arith.addf %18, %31 : vector<2x16xf32>
    %cst_12 = arith.constant 1.000000e+00 : f32
    %33 = vector.broadcast %cst_12 : f32 to vector<2x16xf32>
    %34 = arith.subf %33, %13 : vector<2x16xf32>
    %cst_13 = arith.constant 1.500000e+00 : f32
    %35 = vector.broadcast %cst_13 : f32 to vector<2x16xf32>
    %36 = arith.mulf %35, %34 : vector<2x16xf32>
    %cst_14 = arith.constant 1.500000e+00 : f32
    %37 = vector.broadcast %cst_14 : f32 to vector<2x16xf32>
    %38 = arith.mulf %37, %13 : vector<2x16xf32>
    %cst_15 = arith.constant 6.000000e+00 : f32
    %39 = vector.broadcast %cst_15 : f32 to vector<2x16xf32>
    %40 = arith.subf %39, %38 : vector<2x16xf32>
    %41 = arith.mulf %8, %40 : vector<2x16xf32>
    %cst_16 = arith.constant -6.000000e+00 : f32
    %42 = vector.broadcast %cst_16 : f32 to vector<2x16xf32>
    %43 = arith.addf %42, %41 : vector<2x16xf32>
    %44 = arith.mulf %8, %43 : vector<2x16xf32>
    %cst_17 = arith.constant 1.500000e+00 : f32
    %45 = vector.broadcast %cst_17 : f32 to vector<2x16xf32>
    %46 = arith.addf %45, %44 : vector<2x16xf32>
    %47 = arith.mulf %8, %46 : vector<2x16xf32>
    %cst_18 = arith.constant 0.0416666679 : f32
    %48 = vector.broadcast %cst_18 : f32 to vector<2x16xf32>
    %49 = arith.mulf %48, %47 : vector<2x16xf32>
    %50 = arith.addf %36, %49 : vector<2x16xf32>
    %51 = math.absf %50 : vector<2x16xf32>
    %c15_i32_19 = arith.constant 15 : i32
    %52 = tpu.dynamic_rotate %8 by %c15_i32_19 dim 1 : vector<2x16xf32>, i32 -> vector<2x16xf32>
    %c15_i32_20 = arith.constant 15 : i32
    %53 = tpu.dynamic_rotate %32 by %c15_i32_20 dim 1 : vector<2x16xf32>, i32 -> vector<2x16xf32>
    %c15_i32_21 = arith.constant 15 : i32
    %54 = tpu.dynamic_rotate %51 by %c15_i32_21 dim 1 : vector<2x16xf32>, i32 -> vector<2x16xf32>
    %55 = arith.addf %32, %53 : vector<2x16xf32>
    %cst_22 = arith.constant 5.000000e-01 : f32
    %56 = vector.broadcast %cst_22 : f32 to vector<2x16xf32>
    %57 = arith.mulf %56, %55 : vector<2x16xf32>
    %58 = arith.maximumf %51, %54 : vector<2x16xf32>
    %cst_23 = arith.constant 5.000000e-01 : f32
    %59 = vector.broadcast %cst_23 : f32 to vector<2x16xf32>
    %60 = arith.mulf %59, %58 : vector<2x16xf32>
    %61 = arith.subf %52, %8 : vector<2x16xf32>
    %62 = arith.mulf %60, %61 : vector<2x16xf32>
    %63 = arith.subf %57, %62 : vector<2x16xf32>
    %c1_i32 = arith.constant 1 : i32
    %64 = tpu.dynamic_rotate %63 by %c1_i32 dim 1 : vector<2x16xf32>, i32 -> vector<2x16xf32>
    %65 = arith.subf %63, %64 : vector<2x16xf32>
    %cst_24 = arith.constant 1.000000e-01 : f32
    %66 = vector.broadcast %cst_24 : f32 to vector<2x16xf32>
    %67 = arith.mulf %66, %65 : vector<2x16xf32>
    %68 = arith.subf %8, %67 : vector<2x16xf32>
    %c15_i32_25 = arith.constant 15 : i32
    %69 = tpu.dynamic_rotate %68 by %c15_i32_25 dim 1 : vector<2x16xf32>, i32 -> vector<2x16xf32>
    %c1_i32_26 = arith.constant 1 : i32
    %70 = tpu.dynamic_rotate %68 by %c1_i32_26 dim 1 : vector<2x16xf32>, i32 -> vector<2x16xf32>
    %71 = arith.select %7, %70, %68 : vector<2x16xi1>, vector<2x16xf32>
    %72 = arith.select %5, %69, %71 : vector<2x16xi1>, vector<2x16xf32>
    %c1_i32_27 = arith.constant 1 : i32
    %73 = arith.index_cast %c1_i32_27 : i32 to index
    %c0_28 = arith.constant 0 : index
    %c0_29 = arith.constant 0 : index
    %74 = vector.load %arg2[%73, %c0_28, %c0_29] : memref<8x2x16xf32, #tpu.memory_space<vmem>>, vector<1x2x16xf32>
    %75 = vector.shape_cast %74 : vector<1x2x16xf32> to vector<2x16xf32>
    %76 = vector.shape_cast %72 : vector<2x16xf32> to vector<1x2x16xf32>
    tpu.vector_store %arg2[%73, %c0_28, %c0_29], %76 {strides = array<i32>} : memref<8x2x16xf32, #tpu.memory_space<vmem>>, vector<1x2x16xf32>,
    %77 = arith.mulf %72, %72 : vector<2x16xf32>
    %cst_30 = arith.constant 5.000000e-01 : f32
    %78 = vector.broadcast %cst_30 : f32 to vector<2x16xf32>
    %79 = arith.mulf %78, %77 : vector<2x16xf32>
    %cst_31 = arith.constant 1.500000e+00 : f32
    %80 = vector.broadcast %cst_31 : f32 to vector<2x16xf32>
    %81 = arith.subf %80, %79 : vector<2x16xf32>
    %82 = arith.mulf %72, %81 : vector<2x16xf32>
    %cst_32 = arith.constant 0.0416666679 : f32
    %83 = vector.broadcast %cst_32 : f32 to vector<2x16xf32>
    %84 = arith.mulf %83, %77 : vector<2x16xf32>
    %cst_33 = arith.constant 2.500000e-01 : f32
    %85 = vector.broadcast %cst_33 : f32 to vector<2x16xf32>
    %86 = arith.mulf %85, %77 : vector<2x16xf32>
    %cst_34 = arith.constant 1.500000e+00 : f32
    %87 = vector.broadcast %cst_34 : f32 to vector<2x16xf32>
    %88 = arith.subf %87, %86 : vector<2x16xf32>
    %89 = arith.mulf %72, %88 : vector<2x16xf32>
    %cst_35 = arith.constant -2.000000e+00 : f32
    %90 = vector.broadcast %cst_35 : f32 to vector<2x16xf32>
    %91 = arith.addf %90, %89 : vector<2x16xf32>
    %92 = arith.mulf %72, %91 : vector<2x16xf32>
    %cst_36 = arith.constant 7.500000e-01 : f32
    %93 = vector.broadcast %cst_36 : f32 to vector<2x16xf32>
    %94 = arith.addf %93, %92 : vector<2x16xf32>
    %95 = arith.mulf %84, %94 : vector<2x16xf32>
    %96 = arith.addf %82, %95 : vector<2x16xf32>
    %cst_37 = arith.constant 1.000000e+00 : f32
    %97 = vector.broadcast %cst_37 : f32 to vector<2x16xf32>
    %98 = arith.subf %97, %77 : vector<2x16xf32>
    %cst_38 = arith.constant 1.500000e+00 : f32
    %99 = vector.broadcast %cst_38 : f32 to vector<2x16xf32>
    %100 = arith.mulf %99, %98 : vector<2x16xf32>
    %cst_39 = arith.constant 1.500000e+00 : f32
    %101 = vector.broadcast %cst_39 : f32 to vector<2x16xf32>
    %102 = arith.mulf %101, %77 : vector<2x16xf32>
    %cst_40 = arith.constant 6.000000e+00 : f32
    %103 = vector.broadcast %cst_40 : f32 to vector<2x16xf32>
    %104 = arith.subf %103, %102 : vector<2x16xf32>
    %105 = arith.mulf %72, %104 : vector<2x16xf32>
    %cst_41 = arith.constant -6.000000e+00 : f32
    %106 = vector.broadcast %cst_41 : f32 to vector<2x16xf32>
    %107 = arith.addf %106, %105 : vector<2x16xf32>
    %108 = arith.mulf %72, %107 : vector<2x16xf32>
    %cst_42 = arith.constant 1.500000e+00 : f32
    %109 = vector.broadcast %cst_42 : f32 to vector<2x16xf32>
    %110 = arith.addf %109, %108 : vector<2x16xf32>
    %111 = arith.mulf %72, %110 : vector<2x16xf32>
    %cst_43 = arith.constant 0.0416666679 : f32
    %112 = vector.broadcast %cst_43 : f32 to vector<2x16xf32>
    %113 = arith.mulf %112, %111 : vector<2x16xf32>
    %114 = arith.addf %100, %113 : vector<2x16xf32>
    %115 = math.absf %114 : vector<2x16xf32>
    %c15_i32_44 = arith.constant 15 : i32
    %116 = tpu.dynamic_rotate %72 by %c15_i32_44 dim 1 : vector<2x16xf32>, i32 -> vector<2x16xf32>
    %c15_i32_45 = arith.constant 15 : i32
    %117 = tpu.dynamic_rotate %96 by %c15_i32_45 dim 1 : vector<2x16xf32>, i32 -> vector<2x16xf32>
    %c15_i32_46 = arith.constant 15 : i32
    %118 = tpu.dynamic_rotate %115 by %c15_i32_46 dim 1 : vector<2x16xf32>, i32 -> vector<2x16xf32>
    %119 = arith.addf %96, %117 : vector<2x16xf32>
    %cst_47 = arith.constant 5.000000e-01 : f32
    %120 = vector.broadcast %cst_47 : f32 to vector<2x16xf32>
    %121 = arith.mulf %120, %119 : vector<2x16xf32>
    %122 = arith.maximumf %115, %118 : vector<2x16xf32>
    %cst_48 = arith.constant 5.000000e-01 : f32
    %123 = vector.broadcast %cst_48 : f32 to vector<2x16xf32>
    %124 = arith.mulf %123, %122 : vector<2x16xf32>
    %125 = arith.subf %116, %72 : vector<2x16xf32>
    %126 = arith.mulf %124, %125 : vector<2x16xf32>
    %127 = arith.subf %121, %126 : vector<2x16xf32>
    %c1_i32_49 = arith.constant 1 : i32
    %128 = tpu.dynamic_rotate %127 by %c1_i32_49 dim 1 : vector<2x16xf32>, i32 -> vector<2x16xf32>
    %129 = arith.subf %127, %128 : vector<2x16xf32>
    %cst_50 = arith.constant 1.000000e-01 : f32
    %130 = vector.broadcast %cst_50 : f32 to vector<2x16xf32>
    %131 = arith.mulf %130, %129 : vector<2x16xf32>
    %132 = arith.subf %72, %131 : vector<2x16xf32>
    %c15_i32_51 = arith.constant 15 : i32
    %133 = tpu.dynamic_rotate %132 by %c15_i32_51 dim 1 : vector<2x16xf32>, i32 -> vector<2x16xf32>
    %c1_i32_52 = arith.constant 1 : i32
    %134 = tpu.dynamic_rotate %132 by %c1_i32_52 dim 1 : vector<2x16xf32>, i32 -> vector<2x16xf32>
    %135 = arith.select %7, %134, %132 : vector<2x16xi1>, vector<2x16xf32>
    %136 = arith.select %5, %133, %135 : vector<2x16xi1>, vector<2x16xf32>
    %c2_i32 = arith.constant 2 : i32
    %137 = arith.index_cast %c2_i32 : i32 to index
    %c0_53 = arith.constant 0 : index
    %c0_54 = arith.constant 0 : index
    %138 = vector.load %arg2[%137, %c0_53, %c0_54] : memref<8x2x16xf32, #tpu.memory_space<vmem>>, vector<1x2x16xf32>
    %139 = vector.shape_cast %138 : vector<1x2x16xf32> to vector<2x16xf32>
    %140 = vector.shape_cast %136 : vector<2x16xf32> to vector<1x2x16xf32>
    tpu.vector_store %arg2[%137, %c0_53, %c0_54], %140 {strides = array<i32>} : memref<8x2x16xf32, #tpu.memory_space<vmem>>, vector<1x2x16xf32>,
    %141 = arith.mulf %136, %136 : vector<2x16xf32>
    %cst_55 = arith.constant 5.000000e-01 : f32
    %142 = vector.broadcast %cst_55 : f32 to vector<2x16xf32>
    %143 = arith.mulf %142, %141 : vector<2x16xf32>
    %cst_56 = arith.constant 1.500000e+00 : f32
    %144 = vector.broadcast %cst_56 : f32 to vector<2x16xf32>
    %145 = arith.subf %144, %143 : vector<2x16xf32>
    %146 = arith.mulf %136, %145 : vector<2x16xf32>
    %cst_57 = arith.constant 0.0416666679 : f32
    %147 = vector.broadcast %cst_57 : f32 to vector<2x16xf32>
    %148 = arith.mulf %147, %141 : vector<2x16xf32>
    %cst_58 = arith.constant 2.500000e-01 : f32
    %149 = vector.broadcast %cst_58 : f32 to vector<2x16xf32>
    %150 = arith.mulf %149, %141 : vector<2x16xf32>
    %cst_59 = arith.constant 1.500000e+00 : f32
    %151 = vector.broadcast %cst_59 : f32 to vector<2x16xf32>
    %152 = arith.subf %151, %150 : vector<2x16xf32>
    %153 = arith.mulf %136, %152 : vector<2x16xf32>
    %cst_60 = arith.constant -2.000000e+00 : f32
    %154 = vector.broadcast %cst_60 : f32 to vector<2x16xf32>
    %155 = arith.addf %154, %153 : vector<2x16xf32>
    %156 = arith.mulf %136, %155 : vector<2x16xf32>
    %cst_61 = arith.constant 7.500000e-01 : f32
    %157 = vector.broadcast %cst_61 : f32 to vector<2x16xf32>
    %158 = arith.addf %157, %156 : vector<2x16xf32>
    %159 = arith.mulf %148, %158 : vector<2x16xf32>
    %160 = arith.addf %146, %159 : vector<2x16xf32>
    %cst_62 = arith.constant 1.000000e+00 : f32
    %161 = vector.broadcast %cst_62 : f32 to vector<2x16xf32>
    %162 = arith.subf %161, %141 : vector<2x16xf32>
    %cst_63 = arith.constant 1.500000e+00 : f32
    %163 = vector.broadcast %cst_63 : f32 to vector<2x16xf32>
    %164 = arith.mulf %163, %162 : vector<2x16xf32>
    %cst_64 = arith.constant 1.500000e+00 : f32
    %165 = vector.broadcast %cst_64 : f32 to vector<2x16xf32>
    %166 = arith.mulf %165, %141 : vector<2x16xf32>
    %cst_65 = arith.constant 6.000000e+00 : f32
    %167 = vector.broadcast %cst_65 : f32 to vector<2x16xf32>
    %168 = arith.subf %167, %166 : vector<2x16xf32>
    %169 = arith.mulf %136, %168 : vector<2x16xf32>
    %cst_66 = arith.constant -6.000000e+00 : f32
    %170 = vector.broadcast %cst_66 : f32 to vector<2x16xf32>
    %171 = arith.addf %170, %169 : vector<2x16xf32>
    %172 = arith.mulf %136, %171 : vector<2x16xf32>
    %cst_67 = arith.constant 1.500000e+00 : f32
    %173 = vector.broadcast %cst_67 : f32 to vector<2x16xf32>
    %174 = arith.addf %173, %172 : vector<2x16xf32>
    %175 = arith.mulf %136, %174 : vector<2x16xf32>
    %cst_68 = arith.constant 0.0416666679 : f32
    %176 = vector.broadcast %cst_68 : f32 to vector<2x16xf32>
    %177 = arith.mulf %176, %175 : vector<2x16xf32>
    %178 = arith.addf %164, %177 : vector<2x16xf32>
    %179 = math.absf %178 : vector<2x16xf32>
    %c15_i32_69 = arith.constant 15 : i32
    %180 = tpu.dynamic_rotate %136 by %c15_i32_69 dim 1 : vector<2x16xf32>, i32 -> vector<2x16xf32>
    %c15_i32_70 = arith.constant 15 : i32
    %181 = tpu.dynamic_rotate %160 by %c15_i32_70 dim 1 : vector<2x16xf32>, i32 -> vector<2x16xf32>
    %c15_i32_71 = arith.constant 15 : i32
    %182 = tpu.dynamic_rotate %179 by %c15_i32_71 dim 1 : vector<2x16xf32>, i32 -> vector<2x16xf32>
    %183 = arith.addf %160, %181 : vector<2x16xf32>
    %cst_72 = arith.constant 5.000000e-01 : f32
    %184 = vector.broadcast %cst_72 : f32 to vector<2x16xf32>
    %185 = arith.mulf %184, %183 : vector<2x16xf32>
    %186 = arith.maximumf %179, %182 : vector<2x16xf32>
    %cst_73 = arith.constant 5.000000e-01 : f32
    %187 = vector.broadcast %cst_73 : f32 to vector<2x16xf32>
    %188 = arith.mulf %187, %186 : vector<2x16xf32>
    %189 = arith.subf %180, %136 : vector<2x16xf32>
    %190 = arith.mulf %188, %189 : vector<2x16xf32>
    %191 = arith.subf %185, %190 : vector<2x16xf32>
    %c1_i32_74 = arith.constant 1 : i32
    %192 = tpu.dynamic_rotate %191 by %c1_i32_74 dim 1 : vector<2x16xf32>, i32 -> vector<2x16xf32>
    %193 = arith.subf %191, %192 : vector<2x16xf32>
    %cst_75 = arith.constant 1.000000e-01 : f32
    %194 = vector.broadcast %cst_75 : f32 to vector<2x16xf32>
    %195 = arith.mulf %194, %193 : vector<2x16xf32>
    %196 = arith.subf %136, %195 : vector<2x16xf32>
    %c15_i32_76 = arith.constant 15 : i32
    %197 = tpu.dynamic_rotate %196 by %c15_i32_76 dim 1 : vector<2x16xf32>, i32 -> vector<2x16xf32>
    %c1_i32_77 = arith.constant 1 : i32
    %198 = tpu.dynamic_rotate %196 by %c1_i32_77 dim 1 : vector<2x16xf32>, i32 -> vector<2x16xf32>
    %199 = arith.select %7, %198, %196 : vector<2x16xi1>, vector<2x16xf32>
    %200 = arith.select %5, %197, %199 : vector<2x16xi1>, vector<2x16xf32>
    %c3_i32 = arith.constant 3 : i32
    %201 = arith.index_cast %c3_i32 : i32 to index
    %c0_78 = arith.constant 0 : index
    %c0_79 = arith.constant 0 : index
    %202 = vector.load %arg2[%201, %c0_78, %c0_79] : memref<8x2x16xf32, #tpu.memory_space<vmem>>, vector<1x2x16xf32>
    %203 = vector.shape_cast %202 : vector<1x2x16xf32> to vector<2x16xf32>
    %204 = vector.shape_cast %200 : vector<2x16xf32> to vector<1x2x16xf32>
    tpu.vector_store %arg2[%201, %c0_78, %c0_79], %204 {strides = array<i32>} : memref<8x2x16xf32, #tpu.memory_space<vmem>>, vector<1x2x16xf32>,
    %205 = arith.mulf %200, %200 : vector<2x16xf32>
    %cst_80 = arith.constant 5.000000e-01 : f32
    %206 = vector.broadcast %cst_80 : f32 to vector<2x16xf32>
    %207 = arith.mulf %206, %205 : vector<2x16xf32>
    %cst_81 = arith.constant 1.500000e+00 : f32
    %208 = vector.broadcast %cst_81 : f32 to vector<2x16xf32>
    %209 = arith.subf %208, %207 : vector<2x16xf32>
    %210 = arith.mulf %200, %209 : vector<2x16xf32>
    %cst_82 = arith.constant 0.0416666679 : f32
    %211 = vector.broadcast %cst_82 : f32 to vector<2x16xf32>
    %212 = arith.mulf %211, %205 : vector<2x16xf32>
    %cst_83 = arith.constant 2.500000e-01 : f32
    %213 = vector.broadcast %cst_83 : f32 to vector<2x16xf32>
    %214 = arith.mulf %213, %205 : vector<2x16xf32>
    %cst_84 = arith.constant 1.500000e+00 : f32
    %215 = vector.broadcast %cst_84 : f32 to vector<2x16xf32>
    %216 = arith.subf %215, %214 : vector<2x16xf32>
    %217 = arith.mulf %200, %216 : vector<2x16xf32>
    %cst_85 = arith.constant -2.000000e+00 : f32
    %218 = vector.broadcast %cst_85 : f32 to vector<2x16xf32>
    %219 = arith.addf %218, %217 : vector<2x16xf32>
    %220 = arith.mulf %200, %219 : vector<2x16xf32>
    %cst_86 = arith.constant 7.500000e-01 : f32
    %221 = vector.broadcast %cst_86 : f32 to vector<2x16xf32>
    %222 = arith.addf %221, %220 : vector<2x16xf32>
    %223 = arith.mulf %212, %222 : vector<2x16xf32>
    %224 = arith.addf %210, %223 : vector<2x16xf32>
    %cst_87 = arith.constant 1.000000e+00 : f32
    %225 = vector.broadcast %cst_87 : f32 to vector<2x16xf32>
    %226 = arith.subf %225, %205 : vector<2x16xf32>
    %cst_88 = arith.constant 1.500000e+00 : f32
    %227 = vector.broadcast %cst_88 : f32 to vector<2x16xf32>
    %228 = arith.mulf %227, %226 : vector<2x16xf32>
    %cst_89 = arith.constant 1.500000e+00 : f32
    %229 = vector.broadcast %cst_89 : f32 to vector<2x16xf32>
    %230 = arith.mulf %229, %205 : vector<2x16xf32>
    %cst_90 = arith.constant 6.000000e+00 : f32
    %231 = vector.broadcast %cst_90 : f32 to vector<2x16xf32>
    %232 = arith.subf %231, %230 : vector<2x16xf32>
    %233 = arith.mulf %200, %232 : vector<2x16xf32>
    %cst_91 = arith.constant -6.000000e+00 : f32
    %234 = vector.broadcast %cst_91 : f32 to vector<2x16xf32>
    %235 = arith.addf %234, %233 : vector<2x16xf32>
    %236 = arith.mulf %200, %235 : vector<2x16xf32>
    %cst_92 = arith.constant 1.500000e+00 : f32
    %237 = vector.broadcast %cst_92 : f32 to vector<2x16xf32>
    %238 = arith.addf %237, %236 : vector<2x16xf32>
    %239 = arith.mulf %200, %238 : vector<2x16xf32>
    %cst_93 = arith.constant 0.0416666679 : f32
    %240 = vector.broadcast %cst_93 : f32 to vector<2x16xf32>
    %241 = arith.mulf %240, %239 : vector<2x16xf32>
    %242 = arith.addf %228, %241 : vector<2x16xf32>
    %243 = math.absf %242 : vector<2x16xf32>
    %c15_i32_94 = arith.constant 15 : i32
    %244 = tpu.dynamic_rotate %200 by %c15_i32_94 dim 1 : vector<2x16xf32>, i32 -> vector<2x16xf32>
    %c15_i32_95 = arith.constant 15 : i32
    %245 = tpu.dynamic_rotate %224 by %c15_i32_95 dim 1 : vector<2x16xf32>, i32 -> vector<2x16xf32>
    %c15_i32_96 = arith.constant 15 : i32
    %246 = tpu.dynamic_rotate %243 by %c15_i32_96 dim 1 : vector<2x16xf32>, i32 -> vector<2x16xf32>
    %247 = arith.addf %224, %245 : vector<2x16xf32>
    %cst_97 = arith.constant 5.000000e-01 : f32
    %248 = vector.broadcast %cst_97 : f32 to vector<2x16xf32>
    %249 = arith.mulf %248, %247 : vector<2x16xf32>
    %250 = arith.maximumf %243, %246 : vector<2x16xf32>
    %cst_98 = arith.constant 5.000000e-01 : f32
    %251 = vector.broadcast %cst_98 : f32 to vector<2x16xf32>
    %252 = arith.mulf %251, %250 : vector<2x16xf32>
    %253 = arith.subf %244, %200 : vector<2x16xf32>
    %254 = arith.mulf %252, %253 : vector<2x16xf32>
    %255 = arith.subf %249, %254 : vector<2x16xf32>
    %c1_i32_99 = arith.constant 1 : i32
    %256 = tpu.dynamic_rotate %255 by %c1_i32_99 dim 1 : vector<2x16xf32>, i32 -> vector<2x16xf32>
    %257 = arith.subf %255, %256 : vector<2x16xf32>
    %cst_100 = arith.constant 1.000000e-01 : f32
    %258 = vector.broadcast %cst_100 : f32 to vector<2x16xf32>
    %259 = arith.mulf %258, %257 : vector<2x16xf32>
    %260 = arith.subf %200, %259 : vector<2x16xf32>
    %c15_i32_101 = arith.constant 15 : i32
    %261 = tpu.dynamic_rotate %260 by %c15_i32_101 dim 1 : vector<2x16xf32>, i32 -> vector<2x16xf32>
    %c1_i32_102 = arith.constant 1 : i32
    %262 = tpu.dynamic_rotate %260 by %c1_i32_102 dim 1 : vector<2x16xf32>, i32 -> vector<2x16xf32>
    %263 = arith.select %7, %262, %260 : vector<2x16xi1>, vector<2x16xf32>
    %264 = arith.select %5, %261, %263 : vector<2x16xi1>, vector<2x16xf32>
    %c4_i32 = arith.constant 4 : i32
    %265 = arith.index_cast %c4_i32 : i32 to index
    %c0_103 = arith.constant 0 : index
    %c0_104 = arith.constant 0 : index
    %266 = vector.load %arg2[%265, %c0_103, %c0_104] : memref<8x2x16xf32, #tpu.memory_space<vmem>>, vector<1x2x16xf32>
    %267 = vector.shape_cast %266 : vector<1x2x16xf32> to vector<2x16xf32>
    %268 = vector.shape_cast %264 : vector<2x16xf32> to vector<1x2x16xf32>
    tpu.vector_store %arg2[%265, %c0_103, %c0_104], %268 {strides = array<i32>} : memref<8x2x16xf32, #tpu.memory_space<vmem>>, vector<1x2x16xf32>,
    %269 = arith.mulf %264, %264 : vector<2x16xf32>
    %cst_105 = arith.constant 5.000000e-01 : f32
    %270 = vector.broadcast %cst_105 : f32 to vector<2x16xf32>
    %271 = arith.mulf %270, %269 : vector<2x16xf32>
    %cst_106 = arith.constant 1.500000e+00 : f32
    %272 = vector.broadcast %cst_106 : f32 to vector<2x16xf32>
    %273 = arith.subf %272, %271 : vector<2x16xf32>
    %274 = arith.mulf %264, %273 : vector<2x16xf32>
    %cst_107 = arith.constant 0.0416666679 : f32
    %275 = vector.broadcast %cst_107 : f32 to vector<2x16xf32>
    %276 = arith.mulf %275, %269 : vector<2x16xf32>
    %cst_108 = arith.constant 2.500000e-01 : f32
    %277 = vector.broadcast %cst_108 : f32 to vector<2x16xf32>
    %278 = arith.mulf %277, %269 : vector<2x16xf32>
    %cst_109 = arith.constant 1.500000e+00 : f32
    %279 = vector.broadcast %cst_109 : f32 to vector<2x16xf32>
    %280 = arith.subf %279, %278 : vector<2x16xf32>
    %281 = arith.mulf %264, %280 : vector<2x16xf32>
    %cst_110 = arith.constant -2.000000e+00 : f32
    %282 = vector.broadcast %cst_110 : f32 to vector<2x16xf32>
    %283 = arith.addf %282, %281 : vector<2x16xf32>
    %284 = arith.mulf %264, %283 : vector<2x16xf32>
    %cst_111 = arith.constant 7.500000e-01 : f32
    %285 = vector.broadcast %cst_111 : f32 to vector<2x16xf32>
    %286 = arith.addf %285, %284 : vector<2x16xf32>
    %287 = arith.mulf %276, %286 : vector<2x16xf32>
    %288 = arith.addf %274, %287 : vector<2x16xf32>
    %cst_112 = arith.constant 1.000000e+00 : f32
    %289 = vector.broadcast %cst_112 : f32 to vector<2x16xf32>
    %290 = arith.subf %289, %269 : vector<2x16xf32>
    %cst_113 = arith.constant 1.500000e+00 : f32
    %291 = vector.broadcast %cst_113 : f32 to vector<2x16xf32>
    %292 = arith.mulf %291, %290 : vector<2x16xf32>
    %cst_114 = arith.constant 1.500000e+00 : f32
    %293 = vector.broadcast %cst_114 : f32 to vector<2x16xf32>
    %294 = arith.mulf %293, %269 : vector<2x16xf32>
    %cst_115 = arith.constant 6.000000e+00 : f32
    %295 = vector.broadcast %cst_115 : f32 to vector<2x16xf32>
    %296 = arith.subf %295, %294 : vector<2x16xf32>
    %297 = arith.mulf %264, %296 : vector<2x16xf32>
    %cst_116 = arith.constant -6.000000e+00 : f32
    %298 = vector.broadcast %cst_116 : f32 to vector<2x16xf32>
    %299 = arith.addf %298, %297 : vector<2x16xf32>
    %300 = arith.mulf %264, %299 : vector<2x16xf32>
    %cst_117 = arith.constant 1.500000e+00 : f32
    %301 = vector.broadcast %cst_117 : f32 to vector<2x16xf32>
    %302 = arith.addf %301, %300 : vector<2x16xf32>
    %303 = arith.mulf %264, %302 : vector<2x16xf32>
    %cst_118 = arith.constant 0.0416666679 : f32
    %304 = vector.broadcast %cst_118 : f32 to vector<2x16xf32>
    %305 = arith.mulf %304, %303 : vector<2x16xf32>
    %306 = arith.addf %292, %305 : vector<2x16xf32>
    %307 = math.absf %306 : vector<2x16xf32>
    %c15_i32_119 = arith.constant 15 : i32
    %308 = tpu.dynamic_rotate %264 by %c15_i32_119 dim 1 : vector<2x16xf32>, i32 -> vector<2x16xf32>
    %c15_i32_120 = arith.constant 15 : i32
    %309 = tpu.dynamic_rotate %288 by %c15_i32_120 dim 1 : vector<2x16xf32>, i32 -> vector<2x16xf32>
    %c15_i32_121 = arith.constant 15 : i32
    %310 = tpu.dynamic_rotate %307 by %c15_i32_121 dim 1 : vector<2x16xf32>, i32 -> vector<2x16xf32>
    %311 = arith.addf %288, %309 : vector<2x16xf32>
    %cst_122 = arith.constant 5.000000e-01 : f32
    %312 = vector.broadcast %cst_122 : f32 to vector<2x16xf32>
    %313 = arith.mulf %312, %311 : vector<2x16xf32>
    %314 = arith.maximumf %307, %310 : vector<2x16xf32>
    %cst_123 = arith.constant 5.000000e-01 : f32
    %315 = vector.broadcast %cst_123 : f32 to vector<2x16xf32>
    %316 = arith.mulf %315, %314 : vector<2x16xf32>
    %317 = arith.subf %308, %264 : vector<2x16xf32>
    %318 = arith.mulf %316, %317 : vector<2x16xf32>
    %319 = arith.subf %313, %318 : vector<2x16xf32>
    %c1_i32_124 = arith.constant 1 : i32
    %320 = tpu.dynamic_rotate %319 by %c1_i32_124 dim 1 : vector<2x16xf32>, i32 -> vector<2x16xf32>
    %321 = arith.subf %319, %320 : vector<2x16xf32>
    %cst_125 = arith.constant 1.000000e-01 : f32
    %322 = vector.broadcast %cst_125 : f32 to vector<2x16xf32>
    %323 = arith.mulf %322, %321 : vector<2x16xf32>
    %324 = arith.subf %264, %323 : vector<2x16xf32>
    %c15_i32_126 = arith.constant 15 : i32
    %325 = tpu.dynamic_rotate %324 by %c15_i32_126 dim 1 : vector<2x16xf32>, i32 -> vector<2x16xf32>
    %c1_i32_127 = arith.constant 1 : i32
    %326 = tpu.dynamic_rotate %324 by %c1_i32_127 dim 1 : vector<2x16xf32>, i32 -> vector<2x16xf32>
    %327 = arith.select %7, %326, %324 : vector<2x16xi1>, vector<2x16xf32>
    %328 = arith.select %5, %325, %327 : vector<2x16xi1>, vector<2x16xf32>
    %c5_i32 = arith.constant 5 : i32
    %329 = arith.index_cast %c5_i32 : i32 to index
    %c0_128 = arith.constant 0 : index
    %c0_129 = arith.constant 0 : index
    %330 = vector.load %arg2[%329, %c0_128, %c0_129] : memref<8x2x16xf32, #tpu.memory_space<vmem>>, vector<1x2x16xf32>
    %331 = vector.shape_cast %330 : vector<1x2x16xf32> to vector<2x16xf32>
    %332 = vector.shape_cast %328 : vector<2x16xf32> to vector<1x2x16xf32>
    tpu.vector_store %arg2[%329, %c0_128, %c0_129], %332 {strides = array<i32>} : memref<8x2x16xf32, #tpu.memory_space<vmem>>, vector<1x2x16xf32>,
    %333 = arith.mulf %328, %328 : vector<2x16xf32>
    %cst_130 = arith.constant 5.000000e-01 : f32
    %334 = vector.broadcast %cst_130 : f32 to vector<2x16xf32>
    %335 = arith.mulf %334, %333 : vector<2x16xf32>
    %cst_131 = arith.constant 1.500000e+00 : f32
    %336 = vector.broadcast %cst_131 : f32 to vector<2x16xf32>
    %337 = arith.subf %336, %335 : vector<2x16xf32>
    %338 = arith.mulf %328, %337 : vector<2x16xf32>
    %cst_132 = arith.constant 0.0416666679 : f32
    %339 = vector.broadcast %cst_132 : f32 to vector<2x16xf32>
    %340 = arith.mulf %339, %333 : vector<2x16xf32>
    %cst_133 = arith.constant 2.500000e-01 : f32
    %341 = vector.broadcast %cst_133 : f32 to vector<2x16xf32>
    %342 = arith.mulf %341, %333 : vector<2x16xf32>
    %cst_134 = arith.constant 1.500000e+00 : f32
    %343 = vector.broadcast %cst_134 : f32 to vector<2x16xf32>
    %344 = arith.subf %343, %342 : vector<2x16xf32>
    %345 = arith.mulf %328, %344 : vector<2x16xf32>
    %cst_135 = arith.constant -2.000000e+00 : f32
    %346 = vector.broadcast %cst_135 : f32 to vector<2x16xf32>
    %347 = arith.addf %346, %345 : vector<2x16xf32>
    %348 = arith.mulf %328, %347 : vector<2x16xf32>
    %cst_136 = arith.constant 7.500000e-01 : f32
    %349 = vector.broadcast %cst_136 : f32 to vector<2x16xf32>
    %350 = arith.addf %349, %348 : vector<2x16xf32>
    %351 = arith.mulf %340, %350 : vector<2x16xf32>
    %352 = arith.addf %338, %351 : vector<2x16xf32>
    %cst_137 = arith.constant 1.000000e+00 : f32
    %353 = vector.broadcast %cst_137 : f32 to vector<2x16xf32>
    %354 = arith.subf %353, %333 : vector<2x16xf32>
    %cst_138 = arith.constant 1.500000e+00 : f32
    %355 = vector.broadcast %cst_138 : f32 to vector<2x16xf32>
    %356 = arith.mulf %355, %354 : vector<2x16xf32>
    %cst_139 = arith.constant 1.500000e+00 : f32
    %357 = vector.broadcast %cst_139 : f32 to vector<2x16xf32>
    %358 = arith.mulf %357, %333 : vector<2x16xf32>
    %cst_140 = arith.constant 6.000000e+00 : f32
    %359 = vector.broadcast %cst_140 : f32 to vector<2x16xf32>
    %360 = arith.subf %359, %358 : vector<2x16xf32>
    %361 = arith.mulf %328, %360 : vector<2x16xf32>
    %cst_141 = arith.constant -6.000000e+00 : f32
    %362 = vector.broadcast %cst_141 : f32 to vector<2x16xf32>
    %363 = arith.addf %362, %361 : vector<2x16xf32>
    %364 = arith.mulf %328, %363 : vector<2x16xf32>
    %cst_142 = arith.constant 1.500000e+00 : f32
    %365 = vector.broadcast %cst_142 : f32 to vector<2x16xf32>
    %366 = arith.addf %365, %364 : vector<2x16xf32>
    %367 = arith.mulf %328, %366 : vector<2x16xf32>
    %cst_143 = arith.constant 0.0416666679 : f32
    %368 = vector.broadcast %cst_143 : f32 to vector<2x16xf32>
    %369 = arith.mulf %368, %367 : vector<2x16xf32>
    %370 = arith.addf %356, %369 : vector<2x16xf32>
    %371 = math.absf %370 : vector<2x16xf32>
    %c15_i32_144 = arith.constant 15 : i32
    %372 = tpu.dynamic_rotate %328 by %c15_i32_144 dim 1 : vector<2x16xf32>, i32 -> vector<2x16xf32>
    %c15_i32_145 = arith.constant 15 : i32
    %373 = tpu.dynamic_rotate %352 by %c15_i32_145 dim 1 : vector<2x16xf32>, i32 -> vector<2x16xf32>
    %c15_i32_146 = arith.constant 15 : i32
    %374 = tpu.dynamic_rotate %371 by %c15_i32_146 dim 1 : vector<2x16xf32>, i32 -> vector<2x16xf32>
    %375 = arith.addf %352, %373 : vector<2x16xf32>
    %cst_147 = arith.constant 5.000000e-01 : f32
    %376 = vector.broadcast %cst_147 : f32 to vector<2x16xf32>
    %377 = arith.mulf %376, %375 : vector<2x16xf32>
    %378 = arith.maximumf %371, %374 : vector<2x16xf32>
    %cst_148 = arith.constant 5.000000e-01 : f32
    %379 = vector.broadcast %cst_148 : f32 to vector<2x16xf32>
    %380 = arith.mulf %379, %378 : vector<2x16xf32>
    %381 = arith.subf %372, %328 : vector<2x16xf32>
    %382 = arith.mulf %380, %381 : vector<2x16xf32>
    %383 = arith.subf %377, %382 : vector<2x16xf32>
    %c1_i32_149 = arith.constant 1 : i32
    %384 = tpu.dynamic_rotate %383 by %c1_i32_149 dim 1 : vector<2x16xf32>, i32 -> vector<2x16xf32>
    %385 = arith.subf %383, %384 : vector<2x16xf32>
    %cst_150 = arith.constant 1.000000e-01 : f32
    %386 = vector.broadcast %cst_150 : f32 to vector<2x16xf32>
    %387 = arith.mulf %386, %385 : vector<2x16xf32>
    %388 = arith.subf %328, %387 : vector<2x16xf32>
    %c15_i32_151 = arith.constant 15 : i32
    %389 = tpu.dynamic_rotate %388 by %c15_i32_151 dim 1 : vector<2x16xf32>, i32 -> vector<2x16xf32>
    %c1_i32_152 = arith.constant 1 : i32
    %390 = tpu.dynamic_rotate %388 by %c1_i32_152 dim 1 : vector<2x16xf32>, i32 -> vector<2x16xf32>
    %391 = arith.select %7, %390, %388 : vector<2x16xi1>, vector<2x16xf32>
    %392 = arith.select %5, %389, %391 : vector<2x16xi1>, vector<2x16xf32>
    %c6_i32 = arith.constant 6 : i32
    %393 = arith.index_cast %c6_i32 : i32 to index
    %c0_153 = arith.constant 0 : index
    %c0_154 = arith.constant 0 : index
    %394 = vector.load %arg2[%393, %c0_153, %c0_154] : memref<8x2x16xf32, #tpu.memory_space<vmem>>, vector<1x2x16xf32>
    %395 = vector.shape_cast %394 : vector<1x2x16xf32> to vector<2x16xf32>
    %396 = vector.shape_cast %392 : vector<2x16xf32> to vector<1x2x16xf32>
    tpu.vector_store %arg2[%393, %c0_153, %c0_154], %396 {strides = array<i32>} : memref<8x2x16xf32, #tpu.memory_space<vmem>>, vector<1x2x16xf32>,
    %397 = arith.mulf %392, %392 : vector<2x16xf32>
    %cst_155 = arith.constant 5.000000e-01 : f32
    %398 = vector.broadcast %cst_155 : f32 to vector<2x16xf32>
    %399 = arith.mulf %398, %397 : vector<2x16xf32>
    %cst_156 = arith.constant 1.500000e+00 : f32
    %400 = vector.broadcast %cst_156 : f32 to vector<2x16xf32>
    %401 = arith.subf %400, %399 : vector<2x16xf32>
    %402 = arith.mulf %392, %401 : vector<2x16xf32>
    %cst_157 = arith.constant 0.0416666679 : f32
    %403 = vector.broadcast %cst_157 : f32 to vector<2x16xf32>
    %404 = arith.mulf %403, %397 : vector<2x16xf32>
    %cst_158 = arith.constant 2.500000e-01 : f32
    %405 = vector.broadcast %cst_158 : f32 to vector<2x16xf32>
    %406 = arith.mulf %405, %397 : vector<2x16xf32>
    %cst_159 = arith.constant 1.500000e+00 : f32
    %407 = vector.broadcast %cst_159 : f32 to vector<2x16xf32>
    %408 = arith.subf %407, %406 : vector<2x16xf32>
    %409 = arith.mulf %392, %408 : vector<2x16xf32>
    %cst_160 = arith.constant -2.000000e+00 : f32
    %410 = vector.broadcast %cst_160 : f32 to vector<2x16xf32>
    %411 = arith.addf %410, %409 : vector<2x16xf32>
    %412 = arith.mulf %392, %411 : vector<2x16xf32>
    %cst_161 = arith.constant 7.500000e-01 : f32
    %413 = vector.broadcast %cst_161 : f32 to vector<2x16xf32>
    %414 = arith.addf %413, %412 : vector<2x16xf32>
    %415 = arith.mulf %404, %414 : vector<2x16xf32>
    %416 = arith.addf %402, %415 : vector<2x16xf32>
    %cst_162 = arith.constant 1.000000e+00 : f32
    %417 = vector.broadcast %cst_162 : f32 to vector<2x16xf32>
    %418 = arith.subf %417, %397 : vector<2x16xf32>
    %cst_163 = arith.constant 1.500000e+00 : f32
    %419 = vector.broadcast %cst_163 : f32 to vector<2x16xf32>
    %420 = arith.mulf %419, %418 : vector<2x16xf32>
    %cst_164 = arith.constant 1.500000e+00 : f32
    %421 = vector.broadcast %cst_164 : f32 to vector<2x16xf32>
    %422 = arith.mulf %421, %397 : vector<2x16xf32>
    %cst_165 = arith.constant 6.000000e+00 : f32
    %423 = vector.broadcast %cst_165 : f32 to vector<2x16xf32>
    %424 = arith.subf %423, %422 : vector<2x16xf32>
    %425 = arith.mulf %392, %424 : vector<2x16xf32>
    %cst_166 = arith.constant -6.000000e+00 : f32
    %426 = vector.broadcast %cst_166 : f32 to vector<2x16xf32>
    %427 = arith.addf %426, %425 : vector<2x16xf32>
    %428 = arith.mulf %392, %427 : vector<2x16xf32>
    %cst_167 = arith.constant 1.500000e+00 : f32
    %429 = vector.broadcast %cst_167 : f32 to vector<2x16xf32>
    %430 = arith.addf %429, %428 : vector<2x16xf32>
    %431 = arith.mulf %392, %430 : vector<2x16xf32>
    %cst_168 = arith.constant 0.0416666679 : f32
    %432 = vector.broadcast %cst_168 : f32 to vector<2x16xf32>
    %433 = arith.mulf %432, %431 : vector<2x16xf32>
    %434 = arith.addf %420, %433 : vector<2x16xf32>
    %435 = math.absf %434 : vector<2x16xf32>
    %c15_i32_169 = arith.constant 15 : i32
    %436 = tpu.dynamic_rotate %392 by %c15_i32_169 dim 1 : vector<2x16xf32>, i32 -> vector<2x16xf32>
    %c15_i32_170 = arith.constant 15 : i32
    %437 = tpu.dynamic_rotate %416 by %c15_i32_170 dim 1 : vector<2x16xf32>, i32 -> vector<2x16xf32>
    %c15_i32_171 = arith.constant 15 : i32
    %438 = tpu.dynamic_rotate %435 by %c15_i32_171 dim 1 : vector<2x16xf32>, i32 -> vector<2x16xf32>
    %439 = arith.addf %416, %437 : vector<2x16xf32>
    %cst_172 = arith.constant 5.000000e-01 : f32
    %440 = vector.broadcast %cst_172 : f32 to vector<2x16xf32>
    %441 = arith.mulf %440, %439 : vector<2x16xf32>
    %442 = arith.maximumf %435, %438 : vector<2x16xf32>
    %cst_173 = arith.constant 5.000000e-01 : f32
    %443 = vector.broadcast %cst_173 : f32 to vector<2x16xf32>
    %444 = arith.mulf %443, %442 : vector<2x16xf32>
    %445 = arith.subf %436, %392 : vector<2x16xf32>
    %446 = arith.mulf %444, %445 : vector<2x16xf32>
    %447 = arith.subf %441, %446 : vector<2x16xf32>
    %c1_i32_174 = arith.constant 1 : i32
    %448 = tpu.dynamic_rotate %447 by %c1_i32_174 dim 1 : vector<2x16xf32>, i32 -> vector<2x16xf32>
    %449 = arith.subf %447, %448 : vector<2x16xf32>
    %cst_175 = arith.constant 1.000000e-01 : f32
    %450 = vector.broadcast %cst_175 : f32 to vector<2x16xf32>
    %451 = arith.mulf %450, %449 : vector<2x16xf32>
    %452 = arith.subf %392, %451 : vector<2x16xf32>
    %c15_i32_176 = arith.constant 15 : i32
    %453 = tpu.dynamic_rotate %452 by %c15_i32_176 dim 1 : vector<2x16xf32>, i32 -> vector<2x16xf32>
    %c1_i32_177 = arith.constant 1 : i32
    %454 = tpu.dynamic_rotate %452 by %c1_i32_177 dim 1 : vector<2x16xf32>, i32 -> vector<2x16xf32>
    %455 = arith.select %7, %454, %452 : vector<2x16xi1>, vector<2x16xf32>
    %456 = arith.select %5, %453, %455 : vector<2x16xi1>, vector<2x16xf32>
    %c7_i32 = arith.constant 7 : i32
    %457 = arith.index_cast %c7_i32 : i32 to index
    %c0_178 = arith.constant 0 : index
    %c0_179 = arith.constant 0 : index
    %458 = vector.load %arg2[%457, %c0_178, %c0_179] : memref<8x2x16xf32, #tpu.memory_space<vmem>>, vector<1x2x16xf32>
    %459 = vector.shape_cast %458 : vector<1x2x16xf32> to vector<2x16xf32>
    %460 = vector.shape_cast %456 : vector<2x16xf32> to vector<1x2x16xf32>
    tpu.vector_store %arg2[%457, %c0_178, %c0_179], %460 {strides = array<i32>} : memref<8x2x16xf32, #tpu.memory_space<vmem>>, vector<1x2x16xf32>,
    %461 = arith.mulf %456, %456 : vector<2x16xf32>
    %cst_180 = arith.constant 5.000000e-01 : f32
    %462 = vector.broadcast %cst_180 : f32 to vector<2x16xf32>
    %463 = arith.mulf %462, %461 : vector<2x16xf32>
    %cst_181 = arith.constant 1.500000e+00 : f32
    %464 = vector.broadcast %cst_181 : f32 to vector<2x16xf32>
    %465 = arith.subf %464, %463 : vector<2x16xf32>
    %466 = arith.mulf %456, %465 : vector<2x16xf32>
    %cst_182 = arith.constant 0.0416666679 : f32
    %467 = vector.broadcast %cst_182 : f32 to vector<2x16xf32>
    %468 = arith.mulf %467, %461 : vector<2x16xf32>
    %cst_183 = arith.constant 2.500000e-01 : f32
    %469 = vector.broadcast %cst_183 : f32 to vector<2x16xf32>
    %470 = arith.mulf %469, %461 : vector<2x16xf32>
    %cst_184 = arith.constant 1.500000e+00 : f32
    %471 = vector.broadcast %cst_184 : f32 to vector<2x16xf32>
    %472 = arith.subf %471, %470 : vector<2x16xf32>
    %473 = arith.mulf %456, %472 : vector<2x16xf32>
    %cst_185 = arith.constant -2.000000e+00 : f32
    %474 = vector.broadcast %cst_185 : f32 to vector<2x16xf32>
    %475 = arith.addf %474, %473 : vector<2x16xf32>
    %476 = arith.mulf %456, %475 : vector<2x16xf32>
    %cst_186 = arith.constant 7.500000e-01 : f32
    %477 = vector.broadcast %cst_186 : f32 to vector<2x16xf32>
    %478 = arith.addf %477, %476 : vector<2x16xf32>
    %479 = arith.mulf %468, %478 : vector<2x16xf32>
    %480 = arith.addf %466, %479 : vector<2x16xf32>
    %cst_187 = arith.constant 1.000000e+00 : f32
    %481 = vector.broadcast %cst_187 : f32 to vector<2x16xf32>
    %482 = arith.subf %481, %461 : vector<2x16xf32>
    %cst_188 = arith.constant 1.500000e+00 : f32
    %483 = vector.broadcast %cst_188 : f32 to vector<2x16xf32>
    %484 = arith.mulf %483, %482 : vector<2x16xf32>
    %cst_189 = arith.constant 1.500000e+00 : f32
    %485 = vector.broadcast %cst_189 : f32 to vector<2x16xf32>
    %486 = arith.mulf %485, %461 : vector<2x16xf32>
    %cst_190 = arith.constant 6.000000e+00 : f32
    %487 = vector.broadcast %cst_190 : f32 to vector<2x16xf32>
    %488 = arith.subf %487, %486 : vector<2x16xf32>
    %489 = arith.mulf %456, %488 : vector<2x16xf32>
    %cst_191 = arith.constant -6.000000e+00 : f32
    %490 = vector.broadcast %cst_191 : f32 to vector<2x16xf32>
    %491 = arith.addf %490, %489 : vector<2x16xf32>
    %492 = arith.mulf %456, %491 : vector<2x16xf32>
    %cst_192 = arith.constant 1.500000e+00 : f32
    %493 = vector.broadcast %cst_192 : f32 to vector<2x16xf32>
    %494 = arith.addf %493, %492 : vector<2x16xf32>
    %495 = arith.mulf %456, %494 : vector<2x16xf32>
    %cst_193 = arith.constant 0.0416666679 : f32
    %496 = vector.broadcast %cst_193 : f32 to vector<2x16xf32>
    %497 = arith.mulf %496, %495 : vector<2x16xf32>
    %498 = arith.addf %484, %497 : vector<2x16xf32>
    %499 = math.absf %498 : vector<2x16xf32>
    %c15_i32_194 = arith.constant 15 : i32
    %500 = tpu.dynamic_rotate %456 by %c15_i32_194 dim 1 : vector<2x16xf32>, i32 -> vector<2x16xf32>
    %c15_i32_195 = arith.constant 15 : i32
    %501 = tpu.dynamic_rotate %480 by %c15_i32_195 dim 1 : vector<2x16xf32>, i32 -> vector<2x16xf32>
    %c15_i32_196 = arith.constant 15 : i32
    %502 = tpu.dynamic_rotate %499 by %c15_i32_196 dim 1 : vector<2x16xf32>, i32 -> vector<2x16xf32>
    %503 = arith.addf %480, %501 : vector<2x16xf32>
    %cst_197 = arith.constant 5.000000e-01 : f32
    %504 = vector.broadcast %cst_197 : f32 to vector<2x16xf32>
    %505 = arith.mulf %504, %503 : vector<2x16xf32>
    %506 = arith.maximumf %499, %502 : vector<2x16xf32>
    %cst_198 = arith.constant 5.000000e-01 : f32
    %507 = vector.broadcast %cst_198 : f32 to vector<2x16xf32>
    %508 = arith.mulf %507, %506 : vector<2x16xf32>
    %509 = arith.subf %500, %456 : vector<2x16xf32>
    %510 = arith.mulf %508, %509 : vector<2x16xf32>
    %511 = arith.subf %505, %510 : vector<2x16xf32>
    %c1_i32_199 = arith.constant 1 : i32
    %512 = tpu.dynamic_rotate %511 by %c1_i32_199 dim 1 : vector<2x16xf32>, i32 -> vector<2x16xf32>
    %513 = arith.subf %511, %512 : vector<2x16xf32>
    %cst_200 = arith.constant 1.000000e-01 : f32
    %514 = vector.broadcast %cst_200 : f32 to vector<2x16xf32>
    %515 = arith.mulf %514, %513 : vector<2x16xf32>
    %516 = arith.subf %456, %515 : vector<2x16xf32>
    %c15_i32_201 = arith.constant 15 : i32
    %517 = tpu.dynamic_rotate %516 by %c15_i32_201 dim 1 : vector<2x16xf32>, i32 -> vector<2x16xf32>
    %c1_i32_202 = arith.constant 1 : i32
    %518 = tpu.dynamic_rotate %516 by %c1_i32_202 dim 1 : vector<2x16xf32>, i32 -> vector<2x16xf32>
    %519 = arith.select %7, %518, %516 : vector<2x16xi1>, vector<2x16xf32>
    %520 = arith.select %5, %517, %519 : vector<2x16xi1>, vector<2x16xf32>
    %c8_i32 = arith.constant 8 : i32
    %c0_203 = arith.constant 0 : index
    %c0_204 = arith.constant 0 : index
    %521 = vector.load %arg3[%c0_203, %c0_204] : memref<2x16xf32, #tpu.memory_space<vmem>>, vector<2x16xf32>
    tpu.vector_store %arg3[%c0_203, %c0_204], %520 {strides = array<i32>} : memref<2x16xf32, #tpu.memory_space<vmem>>, vector<2x16xf32>,
    return
  }
  func.func @transform_0(%arg0: i32) -> (i32, i32) {
    %c0_i32 = arith.constant 0 : i32
    %c0_i32_0 = arith.constant 0 : i32
    %c0_i32_1 = arith.constant 0 : i32
    return %c0_i32, %c0_i32_0 : i32, i32
  }
  func.func @transform_1(%arg0: i32) -> (i32, i32, i32) {
    %c0_i32 = arith.constant 0 : i32
    %c0_i32_0 = arith.constant 0 : i32
    %c0_i32_1 = arith.constant 0 : i32
    return %arg0, %c0_i32, %c0_i32_0 : i32, i32, i32
  }
}

</mosaic_0001>

<llo_original>
// kernel: variant_coe_linear1d_forward.1
$region0: #{variant_coe_linear1d_forward.1}
  #allocation0 [shape = 'u32[]', space=smem, size = 0x4, offset = 0x4, fixed_abs, tag = 'smem constant byte address 0x4 - core index']
  #allocation1 [shape = 'u32[72,128]{1,0:T(1,128)}', space=vmem, size = 0x9000, scoped, tag = 'internal scratch']
  #allocation2 [shape = 'f32[2,16]{1,0:T(2,128)}', space=vmem, size = 0x400, scoped, tag = 'scratch operand']
  %s0 = inlined_call_operand.hbm [shape: f32[2,16], index: 0, kind: input, shape index: {}]
  %s1 = inlined_call_operand.hbm [shape: f32[8,2,16], index: 1, kind: output, shape index: {}]
  %s2 = sld [smem:[#allocation0]]
  $region22: #{variant_coe_linear1d_forward.1} parent=0
    _
  %s4 = ssub.s32 1, %s2
  %s5 = scalar_select 0, %s4, %s2
  $region1: #{variant_coe_linear1d_forward.1} parent=0
    #allocation3 [shape = 'u8[1024]{0}', space=vmem, size = 0x400, scoped, tag = 'input window, operand 0, single buffered']
    #allocation4 [shape = 's32[1]{0}', space=sflag, size = 0x4, scoped, tag = 'scoped memory for variant_coe_linear1d_forward.1']
    #allocation5 [shape = 's32[1]{0}', space=sflag, size = 0x4, scoped, tag = 'scoped memory for variant_coe_linear1d_forward.1']
    #allocation6 [shape = 'u8[8192]{0}', space=vmem, size = 0x2000, scoped, tag = 'output window, operand 0, single buffered']
    %6 = vsyncpa [#allocation4], 0
    %7 = vsyncpa [#allocation5], 0
    // Predicated region
    $region2: #{variant_coe_linear1d_forward.1} parent=1 // pred_check
      _
    $region3: #{variant_coe_linear1d_forward.1} parent=1 // pred_check_branch
      %9 = sbr.rel (0) target = $region5
    $region4: #{variant_coe_linear1d_forward.1} parent=1 // pred_region
      %11 = vsyncadd [#allocation4], 0
      %s13 = sshll.u32 %s0, 4
      %s14 = int_to_ptr.hbm [resolvable:$true] %s13
      %s15 = sshll.u32 [#allocation3], 4
      %s16 = int_to_ptr.vmem [resolvable:$true] %s15
      %18 = dma.hbm_to_vmem [thread:$0]  %s14, 32, %s16, [#allocation4]
    $region5: #{variant_coe_linear1d_forward.1} parent=1 // pred_fallthru
      _
    // Predicated region
    $region6: #{variant_coe_linear1d_forward.1} parent=1 // pred_check
      _
    $region7: #{variant_coe_linear1d_forward.1} parent=1 // pred_check_branch
      %20 = sbr.rel (0) target = $region9
    $region8: #{variant_coe_linear1d_forward.1} parent=1 // pred_region
      %22 = dma.done [#allocation4], 32
    $region9: #{variant_coe_linear1d_forward.1} parent=1 // pred_fallthru
      _
    %p23 = scmp.eq.s32.totalorder 0, 0
    // Predicated region
    $region10: #{variant_coe_linear1d_forward.1} parent=1 // pred_check
      %p24 = pneg %p23
    $region11: #{variant_coe_linear1d_forward.1} parent=1 // pred_check_branch
      %26 = sbr.rel (%p24) target = $region13
    $region12: #{variant_coe_linear1d_forward.1} parent=1 // pred_region
      %v27 = vld [vmem:[#allocation3] sm:$0x3]
      %vm28 = vcmask 123904
      %29 = vst.msk [vmem:[#allocation2] sm:$0x3] %vm28, %v27
    $region13: #{variant_coe_linear1d_forward.1} parent=1 // pred_fallthru
      _
    %v30 = vlaneseq
    %v31 = vand.u32 %v30, 127
    %vm32 = vcmp.eq.s32.totalorder %v31, 0
    %vm33 = vcmp.eq.s32.totalorder %v31, 15
    %v34 = vld [vmem:[#allocation2] sm:$0x3]
    %vm35 = vcmask 123904
    %36 = vst.msk [vmem:[#allocation6] sm:$0x3] %vm35, %v34
    %v37 = vmul.f32 %v34, %v34
    %v38 = vmul.f32 %v37, 0.5
    %v39 = vsub.f32 1.5, %v38
    %v40 = vmul.f32 %v34, %v39
    %v41 = vmul.f32 %v37, 0.041666668
    %v42 = vmul.f32 %v37, 0.25
    %v43 = vsub.f32 1.5, %v42
    %v44 = vmul.f32 %v34, %v43
    %v45 = vadd.f32 %v44, -2.0
    %v46 = vmul.f32 %v34, %v45
    %v47 = vadd.f32 %v46, 0.75
    %v48 = vmul.f32 %v41, %v47
    %v49 = vadd.f32 %v40, %v48
    %v50 = vsub.f32 1.0, %v37
    %v51 = vmul.f32 %v50, 1.5
    %v52 = vmul.f32 %v37, 1.5
    %v53 = vsub.f32 6.0, %v52
    %v54 = vmul.f32 %v34, %v53
    %v55 = vadd.f32 %v54, -6.0
    %v56 = vmul.f32 %v34, %v55
    %v57 = vadd.f32 %v56, 1.5
    %v58 = vmul.f32 %v34, %v57
    %v59 = vmul.f32 %v58, 0.041666668
    %v60 = vadd.f32 %v51, %v59
    %v61 = vand.u32 2147483647, %v60
    %vm62 = vcmask 1047680
    %63 = vrot.lane.b32.xlu0 %v34, 16
    %v64 = vpop.permute.xlu0 %63
    %v65 = vsel %vm62, %v64, %v34
    %66 = vrot.lane.b32.xlu0 %v65, 16
    %v67 = vpop.permute.xlu0 %66
    %v68 = vsel %vm62, %v67, %v34
    %69 = vrot.lane.b32.xlu0 %v49, 16
    %v70 = vpop.permute.xlu0 %69
    %v71 = vsel %vm62, %v70, %v49
    %72 = vrot.lane.b32.xlu0 %v71, 16
    %v73 = vpop.permute.xlu0 %72
    %v74 = vsel %vm62, %v73, %v49
    %75 = vrot.lane.b32.xlu0 %v61, 16
    %v76 = vpop.permute.xlu0 %75
    %v77 = vsel %vm62, %v76, %v61
    %78 = vrot.lane.b32.xlu0 %v77, 16
    %v79 = vpop.permute.xlu0 %78
    %v80 = vsel %vm62, %v79, %v61
    %82 = vrot.lane.b32.xlu0 %v74, 127
    %v83 = vpop.permute.xlu0 %82
    %v85 = vadd.f32 %v49, %v83
    %v86 = vmul.f32 %v85, 0.5
    %88 = vrot.lane.b32.xlu0 %v80, 127
    %v89 = vpop.permute.xlu0 %88
    %v91 = vmax.f32 %v61, %v89
    %v92 = vmul.f32 %v91, 0.5
    %94 = vrot.lane.b32.xlu0 %v34, 1
    %v95 = vpop.permute.xlu0 %94
    %v97 = vsub.f32 %v68, %v95
    %99 = vrot.lane.b32.xlu0 %v97, 127
    %v100 = vpop.permute.xlu0 %99
    %v102 = vmul.f32 %v92, %v100
    %v103 = vsub.f32 %v86, %v102
    %104 = vrot.lane.b32.xlu0 %v103, 16
    %v105 = vpop.permute.xlu0 %104
    %v106 = vsel %vm62, %v105, %v103
    %107 = vrot.lane.b32.xlu0 %v106, 16
    %v108 = vpop.permute.xlu0 %107
    %v109 = vsel %vm62, %v108, %v103
    %111 = vrot.lane.b32.xlu0 %v109, 113
    %v112 = vpop.permute.xlu0 %111
    %v114 = vsub.f32 %v103, %v112
    %v115 = vmul.f32 %v114, 0.1
    %v116 = vsub.f32 %v34, %v115
    %117 = vrot.lane.b32.xlu0 %v116, 16
    %v118 = vpop.permute.xlu0 %117
    %v119 = vsel %vm62, %v118, %v116
    %120 = vrot.lane.b32.xlu0 %v119, 16
    %v121 = vpop.permute.xlu0 %120
    %v122 = vsel %vm62, %v121, %v116
    %124 = vrot.lane.b32.xlu0 %v122, 113
    %v125 = vpop.permute.xlu0 %124
    %v127 = vsel %vm33, %v125, %v116
    %128 = vrot.lane.b32.xlu0 %v122, 127
    %v129 = vpop.permute.xlu0 %128
    %v131 = vsel %vm32, %v129, %v127
    %s132 = scalar_lea.vmem [#allocation6], 2
    %133 = vst.msk [vmem:[%s132] sm:$0x3] %vm35, %v131
    %v134 = vmul.f32 %v131, %v131
    %v135 = vmul.f32 %v134, 0.5
    %v136 = vsub.f32 1.5, %v135
    %v137 = vmul.f32 %v131, %v136
    %v138 = vmul.f32 %v134, 0.041666668
    %v139 = vmul.f32 %v134, 0.25
    %v140 = vsub.f32 1.5, %v139
    %v141 = vmul.f32 %v131, %v140
    %v142 = vadd.f32 %v141, -2.0
    %v143 = vmul.f32 %v131, %v142
    %v144 = vadd.f32 %v143, 0.75
    %v145 = vmul.f32 %v138, %v144
    %v146 = vadd.f32 %v137, %v145
    %v147 = vsub.f32 1.0, %v134
    %v148 = vmul.f32 %v147, 1.5
    %v149 = vmul.f32 %v134, 1.5
    %v150 = vsub.f32 6.0, %v149
    %v151 = vmul.f32 %v131, %v150
    %v152 = vadd.f32 %v151, -6.0
    %v153 = vmul.f32 %v131, %v152
    %v154 = vadd.f32 %v153, 1.5
    %v155 = vmul.f32 %v131, %v154
    %v156 = vmul.f32 %v155, 0.041666668
    %v157 = vadd.f32 %v148, %v156
    %v158 = vand.u32 2147483647, %v157
    %159 = vrot.lane.b32.xlu0 %v131, 16
    %v160 = vpop.permute.xlu0 %159
    %v161 = vsel %vm62, %v160, %v131
    %162 = vrot.lane.b32.xlu0 %v161, 16
    %v163 = vpop.permute.xlu0 %162
    %v164 = vsel %vm62, %v163, %v131
    %165 = vrot.lane.b32.xlu0 %v146, 16
    %v166 = vpop.permute.xlu0 %165
    %v167 = vsel %vm62, %v166, %v146
    %168 = vrot.lane.b32.xlu0 %v167, 16
    %v169 = vpop.permute.xlu0 %168
    %v170 = vsel %vm62, %v169, %v146
    %171 = vrot.lane.b32.xlu0 %v158, 16
    %v172 = vpop.permute.xlu0 %171
    %v173 = vsel %vm62, %v172, %v158
    %174 = vrot.lane.b32.xlu0 %v173, 16
    %v175 = vpop.permute.xlu0 %174
    %v176 = vsel %vm62, %v175, %v158
    %178 = vrot.lane.b32.xlu0 %v170, 127
    %v179 = vpop.permute.xlu0 %178
    %v181 = vadd.f32 %v146, %v179
    %v182 = vmul.f32 %v181, 0.5
    %184 = vrot.lane.b32.xlu0 %v176, 127
    %v185 = vpop.permute.xlu0 %184
    %v187 = vmax.f32 %v158, %v185
    %v188 = vmul.f32 %v187, 0.5
    %190 = vrot.lane.b32.xlu0 %v131, 1
    %v191 = vpop.permute.xlu0 %190
    %v193 = vsub.f32 %v164, %v191
    %195 = vrot.lane.b32.xlu0 %v193, 127
    %v196 = vpop.permute.xlu0 %195
    %v198 = vmul.f32 %v188, %v196
    %v199 = vsub.f32 %v182, %v198
    %200 = vrot.lane.b32.xlu0 %v199, 16
    %v201 = vpop.permute.xlu0 %200
    %v202 = vsel %vm62, %v201, %v199
    %203 = vrot.lane.b32.xlu0 %v202, 16
    %v204 = vpop.permute.xlu0 %203
    %v205 = vsel %vm62, %v204, %v199
    %207 = vrot.lane.b32.xlu0 %v205, 113
    %v208 = vpop.permute.xlu0 %207
    %v210 = vsub.f32 %v199, %v208
    %v211 = vmul.f32 %v210, 0.1
    %v212 = vsub.f32 %v131, %v211
    %213 = vrot.lane.b32.xlu0 %v212, 16
    %v214 = vpop.permute.xlu0 %213
    %v215 = vsel %vm62, %v214, %v212
    %216 = vrot.lane.b32.xlu0 %v215, 16
    %v217 = vpop.permute.xlu0 %216
    %v218 = vsel %vm62, %v217, %v212
    %220 = vrot.lane.b32.xlu0 %v218, 113
    %v221 = vpop.permute.xlu0 %220
    %v223 = vsel %vm33, %v221, %v212
    %224 = vrot.lane.b32.xlu0 %v218, 127
    %v225 = vpop.permute.xlu0 %224
    %v227 = vsel %vm32, %v225, %v223
    %s228 = scalar_lea.vmem [#allocation6], 4
    %229 = vst.msk [vmem:[%s228] sm:$0x3] %vm35, %v227
    %v230 = vmul.f32 %v227, %v227
    %v231 = vmul.f32 %v230, 0.5
    %v232 = vsub.f32 1.5, %v231
    %v233 = vmul.f32 %v227, %v232
    %v234 = vmul.f32 %v230, 0.041666668
    %v235 = vmul.f32 %v230, 0.25
    %v236 = vsub.f32 1.5, %v235
    %v237 = vmul.f32 %v227, %v236
    %v238 = vadd.f32 %v237, -2.0
    %v239 = vmul.f32 %v227, %v238
    %v240 = vadd.f32 %v239, 0.75
    %v241 = vmul.f32 %v234, %v240
    %v242 = vadd.f32 %v233, %v241
    %v243 = vsub.f32 1.0, %v230
    %v244 = vmul.f32 %v243, 1.5
    %v245 = vmul.f32 %v230, 1.5
    %v246 = vsub.f32 6.0, %v245
    %v247 = vmul.f32 %v227, %v246
    %v248 = vadd.f32 %v247, -6.0
    %v249 = vmul.f32 %v227, %v248
    %v250 = vadd.f32 %v249, 1.5
    %v251 = vmul.f32 %v227, %v250
    %v252 = vmul.f32 %v251, 0.041666668
    %v253 = vadd.f32 %v244, %v252
    %v254 = vand.u32 2147483647, %v253
    %255 = vrot.lane.b32.xlu0 %v227, 16
    %v256 = vpop.permute.xlu0 %255
    %v257 = vsel %vm62, %v256, %v227
    %258 = vrot.lane.b32.xlu0 %v257, 16
    %v259 = vpop.permute.xlu0 %258
    %v260 = vsel %vm62, %v259, %v227
    %261 = vrot.lane.b32.xlu0 %v242, 16
    %v262 = vpop.permute.xlu0 %261
    %v263 = vsel %vm62, %v262, %v242
    %264 = vrot.lane.b32.xlu0 %v263, 16
    %v265 = vpop.permute.xlu0 %264
    %v266 = vsel %vm62, %v265, %v242
    %267 = vrot.lane.b32.xlu0 %v254, 16
    %v268 = vpop.permute.xlu0 %267
    %v269 = vsel %vm62, %v268, %v254
    %270 = vrot.lane.b32.xlu0 %v269, 16
    %v271 = vpop.permute.xlu0 %270
    %v272 = vsel %vm62, %v271, %v254
    %274 = vrot.lane.b32.xlu0 %v266, 127
    %v275 = vpop.permute.xlu0 %274
    %v277 = vadd.f32 %v242, %v275
    %v278 = vmul.f32 %v277, 0.5
    %280 = vrot.lane.b32.xlu0 %v272, 127
    %v281 = vpop.permute.xlu0 %280
    %v283 = vmax.f32 %v254, %v281
    %v284 = vmul.f32 %v283, 0.5
    %286 = vrot.lane.b32.xlu0 %v227, 1
    %v287 = vpop.permute.xlu0 %286
    %v289 = vsub.f32 %v260, %v287
    %291 = vrot.lane.b32.xlu0 %v289, 127
    %v292 = vpop.permute.xlu0 %291
    %v294 = vmul.f32 %v284, %v292
    %v295 = vsub.f32 %v278, %v294
    %296 = vrot.lane.b32.xlu0 %v295, 16
    %v297 = vpop.permute.xlu0 %296
    %v298 = vsel %vm62, %v297, %v295
    %299 = vrot.lane.b32.xlu0 %v298, 16
    %v300 = vpop.permute.xlu0 %299
    %v301 = vsel %vm62, %v300, %v295
    %303 = vrot.lane.b32.xlu0 %v301, 113
    %v304 = vpop.permute.xlu0 %303
    %v306 = vsub.f32 %v295, %v304
    %v307 = vmul.f32 %v306, 0.1
    %v308 = vsub.f32 %v227, %v307
    %309 = vrot.lane.b32.xlu0 %v308, 16
    %v310 = vpop.permute.xlu0 %309
    %v311 = vsel %vm62, %v310, %v308
    %312 = vrot.lane.b32.xlu0 %v311, 16
    %v313 = vpop.permute.xlu0 %312
    %v314 = vsel %vm62, %v313, %v308
    %316 = vrot.lane.b32.xlu0 %v314, 113
    %v317 = vpop.permute.xlu0 %316
    %v319 = vsel %vm33, %v317, %v308
    %320 = vrot.lane.b32.xlu0 %v314, 127
    %v321 = vpop.permute.xlu0 %320
    %v323 = vsel %vm32, %v321, %v319
    %s324 = scalar_lea.vmem [#allocation6], 6
    %325 = vst.msk [vmem:[%s324] sm:$0x3] %vm35, %v323
    %v326 = vmul.f32 %v323, %v323
    %v327 = vmul.f32 %v326, 0.5
    %v328 = vsub.f32 1.5, %v327
    %v329 = vmul.f32 %v323, %v328
    %v330 = vmul.f32 %v326, 0.041666668
    %v331 = vmul.f32 %v326, 0.25
    %v332 = vsub.f32 1.5, %v331
    %v333 = vmul.f32 %v323, %v332
    %v334 = vadd.f32 %v333, -2.0
    %v335 = vmul.f32 %v323, %v334
    %v336 = vadd.f32 %v335, 0.75
    %v337 = vmul.f32 %v330, %v336
    %v338 = vadd.f32 %v329, %v337
    %v339 = vsub.f32 1.0, %v326
    %v340 = vmul.f32 %v339, 1.5
    %v341 = vmul.f32 %v326, 1.5
    %v342 = vsub.f32 6.0, %v341
    %v343 = vmul.f32 %v323, %v342
    %v344 = vadd.f32 %v343, -6.0
    %v345 = vmul.f32 %v323, %v344
    %v346 = vadd.f32 %v345, 1.5
    %v347 = vmul.f32 %v323, %v346
    %v348 = vmul.f32 %v347, 0.041666668
    %v349 = vadd.f32 %v340, %v348
    %v350 = vand.u32 2147483647, %v349
    %351 = vrot.lane.b32.xlu0 %v323, 16
    %v352 = vpop.permute.xlu0 %351
    %v353 = vsel %vm62, %v352, %v323
    %354 = vrot.lane.b32.xlu0 %v353, 16
    %v355 = vpop.permute.xlu0 %354
    %v356 = vsel %vm62, %v355, %v323
    %357 = vrot.lane.b32.xlu0 %v338, 16
    %v358 = vpop.permute.xlu0 %357
    %v359 = vsel %vm62, %v358, %v338
    %360 = vrot.lane.b32.xlu0 %v359, 16
    %v361 = vpop.permute.xlu0 %360
    %v362 = vsel %vm62, %v361, %v338
    %363 = vrot.lane.b32.xlu0 %v350, 16
    %v364 = vpop.permute.xlu0 %363
    %v365 = vsel %vm62, %v364, %v350
    %366 = vrot.lane.b32.xlu0 %v365, 16
    %v367 = vpop.permute.xlu0 %366
    %v368 = vsel %vm62, %v367, %v350
    %370 = vrot.lane.b32.xlu0 %v362, 127
    %v371 = vpop.permute.xlu0 %370
    %v373 = vadd.f32 %v338, %v371
    %v374 = vmul.f32 %v373, 0.5
    %376 = vrot.lane.b32.xlu0 %v368, 127
    %v377 = vpop.permute.xlu0 %376
    %v379 = vmax.f32 %v350, %v377
    %v380 = vmul.f32 %v379, 0.5
    %382 = vrot.lane.b32.xlu0 %v323, 1
    %v383 = vpop.permute.xlu0 %382
    %v385 = vsub.f32 %v356, %v383
    %387 = vrot.lane.b32.xlu0 %v385, 127
    %v388 = vpop.permute.xlu0 %387
    %v390 = vmul.f32 %v380, %v388
    %v391 = vsub.f32 %v374, %v390
    %392 = vrot.lane.b32.xlu0 %v391, 16
    %v393 = vpop.permute.xlu0 %392
    %v394 = vsel %vm62, %v393, %v391
    %395 = vrot.lane.b32.xlu0 %v394, 16
    %v396 = vpop.permute.xlu0 %395
    %v397 = vsel %vm62, %v396, %v391
    %399 = vrot.lane.b32.xlu0 %v397, 113
    %v400 = vpop.permute.xlu0 %399
    %v402 = vsub.f32 %v391, %v400
    %v403 = vmul.f32 %v402, 0.1
    %v404 = vsub.f32 %v323, %v403
    %405 = vrot.lane.b32.xlu0 %v404, 16
    %v406 = vpop.permute.xlu0 %405
    %v407 = vsel %vm62, %v406, %v404
    %408 = vrot.lane.b32.xlu0 %v407, 16
    %v409 = vpop.permute.xlu0 %408
    %v410 = vsel %vm62, %v409, %v404
    %412 = vrot.lane.b32.xlu0 %v410, 113
    %v413 = vpop.permute.xlu0 %412
    %v415 = vsel %vm33, %v413, %v404
    %416 = vrot.lane.b32.xlu0 %v410, 127
    %v417 = vpop.permute.xlu0 %416
    %v419 = vsel %vm32, %v417, %v415
    %s420 = scalar_lea.vmem [#allocation6], 8
    %421 = vst.msk [vmem:[%s420] sm:$0x3] %vm35, %v419
    %v422 = vmul.f32 %v419, %v419
    %v423 = vmul.f32 %v422, 0.5
    %v424 = vsub.f32 1.5, %v423
    %v425 = vmul.f32 %v419, %v424
    %v426 = vmul.f32 %v422, 0.041666668
    %v427 = vmul.f32 %v422, 0.25
    %v428 = vsub.f32 1.5, %v427
    %v429 = vmul.f32 %v419, %v428
    %v430 = vadd.f32 %v429, -2.0
    %v431 = vmul.f32 %v419, %v430
    %v432 = vadd.f32 %v431, 0.75
    %v433 = vmul.f32 %v426, %v432
    %v434 = vadd.f32 %v425, %v433
    %v435 = vsub.f32 1.0, %v422
    %v436 = vmul.f32 %v435, 1.5
    %v437 = vmul.f32 %v422, 1.5
    %v438 = vsub.f32 6.0, %v437
    %v439 = vmul.f32 %v419, %v438
    %v440 = vadd.f32 %v439, -6.0
    %v441 = vmul.f32 %v419, %v440
    %v442 = vadd.f32 %v441, 1.5
    %v443 = vmul.f32 %v419, %v442
    %v444 = vmul.f32 %v443, 0.041666668
    %v445 = vadd.f32 %v436, %v444
    %v446 = vand.u32 2147483647, %v445
    %447 = vrot.lane.b32.xlu0 %v419, 16
    %v448 = vpop.permute.xlu0 %447
    %v449 = vsel %vm62, %v448, %v419
    %450 = vrot.lane.b32.xlu0 %v449, 16
    %v451 = vpop.permute.xlu0 %450
    %v452 = vsel %vm62, %v451, %v419
    %453 = vrot.lane.b32.xlu0 %v434, 16
    %v454 = vpop.permute.xlu0 %453
    %v455 = vsel %vm62, %v454, %v434
    %456 = vrot.lane.b32.xlu0 %v455, 16
    %v457 = vpop.permute.xlu0 %456
    %v458 = vsel %vm62, %v457, %v434
    %459 = vrot.lane.b32.xlu0 %v446, 16
    %v460 = vpop.permute.xlu0 %459
    %v461 = vsel %vm62, %v460, %v446
    %462 = vrot.lane.b32.xlu0 %v461, 16
    %v463 = vpop.permute.xlu0 %462
    %v464 = vsel %vm62, %v463, %v446
    %466 = vrot.lane.b32.xlu0 %v458, 127
    %v467 = vpop.permute.xlu0 %466
    %v469 = vadd.f32 %v434, %v467
    %v470 = vmul.f32 %v469, 0.5
    %472 = vrot.lane.b32.xlu0 %v464, 127
    %v473 = vpop.permute.xlu0 %472
    %v475 = vmax.f32 %v446, %v473
    %v476 = vmul.f32 %v475, 0.5
    %478 = vrot.lane.b32.xlu0 %v419, 1
    %v479 = vpop.permute.xlu0 %478
    %v481 = vsub.f32 %v452, %v479
    %483 = vrot.lane.b32.xlu0 %v481, 127
    %v484 = vpop.permute.xlu0 %483
    %v486 = vmul.f32 %v476, %v484
    %v487 = vsub.f32 %v470, %v486
    %488 = vrot.lane.b32.xlu0 %v487, 16
    %v489 = vpop.permute.xlu0 %488
    %v490 = vsel %vm62, %v489, %v487
    %491 = vrot.lane.b32.xlu0 %v490, 16
    %v492 = vpop.permute.xlu0 %491
    %v493 = vsel %vm62, %v492, %v487
    %495 = vrot.lane.b32.xlu0 %v493, 113
    %v496 = vpop.permute.xlu0 %495
    %v498 = vsub.f32 %v487, %v496
    %v499 = vmul.f32 %v498, 0.1
    %v500 = vsub.f32 %v419, %v499
    %501 = vrot.lane.b32.xlu0 %v500, 16
    %v502 = vpop.permute.xlu0 %501
    %v503 = vsel %vm62, %v502, %v500
    %504 = vrot.lane.b32.xlu0 %v503, 16
    %v505 = vpop.permute.xlu0 %504
    %v506 = vsel %vm62, %v505, %v500
    %508 = vrot.lane.b32.xlu0 %v506, 113
    %v509 = vpop.permute.xlu0 %508
    %v511 = vsel %vm33, %v509, %v500
    %512 = vrot.lane.b32.xlu0 %v506, 127
    %v513 = vpop.permute.xlu0 %512
    %v515 = vsel %vm32, %v513, %v511
    %s516 = scalar_lea.vmem [#allocation6], 10
    %517 = vst.msk [vmem:[%s516] sm:$0x3] %vm35, %v515
    %v518 = vmul.f32 %v515, %v515
    %v519 = vmul.f32 %v518, 0.5
    %v520 = vsub.f32 1.5, %v519
    %v521 = vmul.f32 %v515, %v520
    %v522 = vmul.f32 %v518, 0.041666668
    %v523 = vmul.f32 %v518, 0.25
    %v524 = vsub.f32 1.5, %v523
    %v525 = vmul.f32 %v515, %v524
    %v526 = vadd.f32 %v525, -2.0
    %v527 = vmul.f32 %v515, %v526
    %v528 = vadd.f32 %v527, 0.75
    %v529 = vmul.f32 %v522, %v528
    %v530 = vadd.f32 %v521, %v529
    %v531 = vsub.f32 1.0, %v518
    %v532 = vmul.f32 %v531, 1.5
    %v533 = vmul.f32 %v518, 1.5
    %v534 = vsub.f32 6.0, %v533
    %v535 = vmul.f32 %v515, %v534
    %v536 = vadd.f32 %v535, -6.0
    %v537 = vmul.f32 %v515, %v536
    %v538 = vadd.f32 %v537, 1.5
    %v539 = vmul.f32 %v515, %v538
    %v540 = vmul.f32 %v539, 0.041666668
    %v541 = vadd.f32 %v532, %v540
    %v542 = vand.u32 2147483647, %v541
    %543 = vrot.lane.b32.xlu0 %v515, 16
    %v544 = vpop.permute.xlu0 %543
    %v545 = vsel %vm62, %v544, %v515
    %546 = vrot.lane.b32.xlu0 %v545, 16
    %v547 = vpop.permute.xlu0 %546
    %v548 = vsel %vm62, %v547, %v515
    %549 = vrot.lane.b32.xlu0 %v530, 16
    %v550 = vpop.permute.xlu0 %549
    %v551 = vsel %vm62, %v550, %v530
    %552 = vrot.lane.b32.xlu0 %v551, 16
    %v553 = vpop.permute.xlu0 %552
    %v554 = vsel %vm62, %v553, %v530
    %555 = vrot.lane.b32.xlu0 %v542, 16
    %v556 = vpop.permute.xlu0 %555
    %v557 = vsel %vm62, %v556, %v542
    %558 = vrot.lane.b32.xlu0 %v557, 16
    %v559 = vpop.permute.xlu0 %558
    %v560 = vsel %vm62, %v559, %v542
    %562 = vrot.lane.b32.xlu0 %v554, 127
    %v563 = vpop.permute.xlu0 %562
    %v565 = vadd.f32 %v530, %v563
    %v566 = vmul.f32 %v565, 0.5
    %568 = vrot.lane.b32.xlu0 %v560, 127
    %v569 = vpop.permute.xlu0 %568
    %v571 = vmax.f32 %v542, %v569
    %v572 = vmul.f32 %v571, 0.5
    %574 = vrot.lane.b32.xlu0 %v515, 1
    %v575 = vpop.permute.xlu0 %574
    %v577 = vsub.f32 %v548, %v575
    %579 = vrot.lane.b32.xlu0 %v577, 127
    %v580 = vpop.permute.xlu0 %579
    %v582 = vmul.f32 %v572, %v580
    %v583 = vsub.f32 %v566, %v582
    %584 = vrot.lane.b32.xlu0 %v583, 16
    %v585 = vpop.permute.xlu0 %584
    %v586 = vsel %vm62, %v585, %v583
    %587 = vrot.lane.b32.xlu0 %v586, 16
    %v588 = vpop.permute.xlu0 %587
    %v589 = vsel %vm62, %v588, %v583
    %591 = vrot.lane.b32.xlu0 %v589, 113
    %v592 = vpop.permute.xlu0 %591
    %v594 = vsub.f32 %v583, %v592
    %v595 = vmul.f32 %v594, 0.1
    %v596 = vsub.f32 %v515, %v595
    %597 = vrot.lane.b32.xlu0 %v596, 16
    %v598 = vpop.permute.xlu0 %597
    %v599 = vsel %vm62, %v598, %v596
    %600 = vrot.lane.b32.xlu0 %v599, 16
    %v601 = vpop.permute.xlu0 %600
    %v602 = vsel %vm62, %v601, %v596
    %604 = vrot.lane.b32.xlu0 %v602, 113
    %v605 = vpop.permute.xlu0 %604
    %v607 = vsel %vm33, %v605, %v596
    %608 = vrot.lane.b32.xlu0 %v602, 127
    %v609 = vpop.permute.xlu0 %608
    %v611 = vsel %vm32, %v609, %v607
    %s612 = scalar_lea.vmem [#allocation6], 12
    %613 = vst.msk [vmem:[%s612] sm:$0x3] %vm35, %v611
    %v614 = vmul.f32 %v611, %v611
    %v615 = vmul.f32 %v614, 0.5
    %v616 = vsub.f32 1.5, %v615
    %v617 = vmul.f32 %v611, %v616
    %v618 = vmul.f32 %v614, 0.041666668
    %v619 = vmul.f32 %v614, 0.25
    %v620 = vsub.f32 1.5, %v619
    %v621 = vmul.f32 %v611, %v620
    %v622 = vadd.f32 %v621, -2.0
    %v623 = vmul.f32 %v611, %v622
    %v624 = vadd.f32 %v623, 0.75
    %v625 = vmul.f32 %v618, %v624
    %v626 = vadd.f32 %v617, %v625
    %v627 = vsub.f32 1.0, %v614
    %v628 = vmul.f32 %v627, 1.5
    %v629 = vmul.f32 %v614, 1.5
    %v630 = vsub.f32 6.0, %v629
    %v631 = vmul.f32 %v611, %v630
    %v632 = vadd.f32 %v631, -6.0
    %v633 = vmul.f32 %v611, %v632
    %v634 = vadd.f32 %v633, 1.5
    %v635 = vmul.f32 %v611, %v634
    %v636 = vmul.f32 %v635, 0.041666668
    %v637 = vadd.f32 %v628, %v636
    %v638 = vand.u32 2147483647, %v637
    %639 = vrot.lane.b32.xlu0 %v611, 16
    %v640 = vpop.permute.xlu0 %639
    %v641 = vsel %vm62, %v640, %v611
    %642 = vrot.lane.b32.xlu0 %v641, 16
    %v643 = vpop.permute.xlu0 %642
    %v644 = vsel %vm62, %v643, %v611
    %645 = vrot.lane.b32.xlu0 %v626, 16
    %v646 = vpop.permute.xlu0 %645
    %v647 = vsel %vm62, %v646, %v626
    %648 = vrot.lane.b32.xlu0 %v647, 16
    %v649 = vpop.permute.xlu0 %648
    %v650 = vsel %vm62, %v649, %v626
    %651 = vrot.lane.b32.xlu0 %v638, 16
    %v652 = vpop.permute.xlu0 %651
    %v653 = vsel %vm62, %v652, %v638
    %654 = vrot.lane.b32.xlu0 %v653, 16
    %v655 = vpop.permute.xlu0 %654
    %v656 = vsel %vm62, %v655, %v638
    %658 = vrot.lane.b32.xlu0 %v650, 127
    %v659 = vpop.permute.xlu0 %658
    %v661 = vadd.f32 %v626, %v659
    %v662 = vmul.f32 %v661, 0.5
    %664 = vrot.lane.b32.xlu0 %v656, 127
    %v665 = vpop.permute.xlu0 %664
    %v667 = vmax.f32 %v638, %v665
    %v668 = vmul.f32 %v667, 0.5
    %670 = vrot.lane.b32.xlu0 %v611, 1
    %v671 = vpop.permute.xlu0 %670
    %v673 = vsub.f32 %v644, %v671
    %675 = vrot.lane.b32.xlu0 %v673, 127
    %v676 = vpop.permute.xlu0 %675
    %v678 = vmul.f32 %v668, %v676
    %v679 = vsub.f32 %v662, %v678
    %680 = vrot.lane.b32.xlu0 %v679, 16
    %v681 = vpop.permute.xlu0 %680
    %v682 = vsel %vm62, %v681, %v679
    %683 = vrot.lane.b32.xlu0 %v682, 16
    %v684 = vpop.permute.xlu0 %683
    %v685 = vsel %vm62, %v684, %v679
    %687 = vrot.lane.b32.xlu0 %v685, 113
    %v688 = vpop.permute.xlu0 %687
    %v690 = vsub.f32 %v679, %v688
    %v691 = vmul.f32 %v690, 0.1
    %v692 = vsub.f32 %v611, %v691
    %693 = vrot.lane.b32.xlu0 %v692, 16
    %v694 = vpop.permute.xlu0 %693
    %v695 = vsel %vm62, %v694, %v692
    %696 = vrot.lane.b32.xlu0 %v695, 16
    %v697 = vpop.permute.xlu0 %696
    %v698 = vsel %vm62, %v697, %v692
    %700 = vrot.lane.b32.xlu0 %v698, 113
    %v701 = vpop.permute.xlu0 %700
    %v703 = vsel %vm33, %v701, %v692
    %704 = vrot.lane.b32.xlu0 %v698, 127
    %v705 = vpop.permute.xlu0 %704
    %v707 = vsel %vm32, %v705, %v703
    %s708 = scalar_lea.vmem [#allocation6], 14
    %709 = vst.msk [vmem:[%s708] sm:$0x3] %vm35, %v707
    %v710 = vmul.f32 %v707, %v707
    %v711 = vmul.f32 %v710, 0.5
    %v712 = vsub.f32 1.5, %v711
    %v713 = vmul.f32 %v707, %v712
    %v714 = vmul.f32 %v710, 0.041666668
    %v715 = vmul.f32 %v710, 0.25
    %v716 = vsub.f32 1.5, %v715
    %v717 = vmul.f32 %v707, %v716
    %v718 = vadd.f32 %v717, -2.0
    %v719 = vmul.f32 %v707, %v718
    %v720 = vadd.f32 %v719, 0.75
    %v721 = vmul.f32 %v714, %v720
    %v722 = vadd.f32 %v713, %v721
    %v723 = vsub.f32 1.0, %v710
    %v724 = vmul.f32 %v723, 1.5
    %v725 = vmul.f32 %v710, 1.5
    %v726 = vsub.f32 6.0, %v725
    %v727 = vmul.f32 %v707, %v726
    %v728 = vadd.f32 %v727, -6.0
    %v729 = vmul.f32 %v707, %v728
    %v730 = vadd.f32 %v729, 1.5
    %v731 = vmul.f32 %v707, %v730
    %v732 = vmul.f32 %v731, 0.041666668
    %v733 = vadd.f32 %v724, %v732
    %v734 = vand.u32 2147483647, %v733
    %735 = vrot.lane.b32.xlu0 %v707, 16
    %v736 = vpop.permute.xlu0 %735
    %v737 = vsel %vm62, %v736, %v707
    %738 = vrot.lane.b32.xlu0 %v737, 16
    %v739 = vpop.permute.xlu0 %738
    %v740 = vsel %vm62, %v739, %v707
    %741 = vrot.lane.b32.xlu0 %v722, 16
    %v742 = vpop.permute.xlu0 %741
    %v743 = vsel %vm62, %v742, %v722
    %744 = vrot.lane.b32.xlu0 %v743, 16
    %v745 = vpop.permute.xlu0 %744
    %v746 = vsel %vm62, %v745, %v722
    %747 = vrot.lane.b32.xlu0 %v734, 16
    %v748 = vpop.permute.xlu0 %747
    %v749 = vsel %vm62, %v748, %v734
    %750 = vrot.lane.b32.xlu0 %v749, 16
    %v751 = vpop.permute.xlu0 %750
    %v752 = vsel %vm62, %v751, %v734
    %754 = vrot.lane.b32.xlu0 %v746, 127
    %v755 = vpop.permute.xlu0 %754
    %v757 = vadd.f32 %v722, %v755
    %v758 = vmul.f32 %v757, 0.5
    %760 = vrot.lane.b32.xlu0 %v752, 127
    %v761 = vpop.permute.xlu0 %760
    %v763 = vmax.f32 %v734, %v761
    %v764 = vmul.f32 %v763, 0.5
    %766 = vrot.lane.b32.xlu0 %v707, 1
    %v767 = vpop.permute.xlu0 %766
    %v769 = vsub.f32 %v740, %v767
    %771 = vrot.lane.b32.xlu0 %v769, 127
    %v772 = vpop.permute.xlu0 %771
    %v774 = vmul.f32 %v764, %v772
    %v775 = vsub.f32 %v758, %v774
    %776 = vrot.lane.b32.xlu0 %v775, 16
    %v777 = vpop.permute.xlu0 %776
    %v778 = vsel %vm62, %v777, %v775
    %779 = vrot.lane.b32.xlu0 %v778, 16
    %v780 = vpop.permute.xlu0 %779
    %v781 = vsel %vm62, %v780, %v775
    %783 = vrot.lane.b32.xlu0 %v781, 113
    %v784 = vpop.permute.xlu0 %783
    %v786 = vsub.f32 %v775, %v784
    %v787 = vmul.f32 %v786, 0.1
    %v788 = vsub.f32 %v707, %v787
    %789 = vrot.lane.b32.xlu0 %v788, 16
    %v790 = vpop.permute.xlu0 %789
    %v791 = vsel %vm62, %v790, %v788
    %792 = vrot.lane.b32.xlu0 %v791, 16
    %v793 = vpop.permute.xlu0 %792
    %v794 = vsel %vm62, %v793, %v788
    %796 = vrot.lane.b32.xlu0 %v794, 113
    %v797 = vpop.permute.xlu0 %796
    %v799 = vsel %vm33, %v797, %v788
    %800 = vrot.lane.b32.xlu0 %v794, 127
    %v801 = vpop.permute.xlu0 %800
    %v803 = vsel %vm32, %v801, %v799
    %804 = vst.msk [vmem:[#allocation2] sm:$0x3] %vm35, %v803
    // Predicated region
    $region14: #{variant_coe_linear1d_forward.1} parent=1 // pred_check
      _
    $region15: #{variant_coe_linear1d_forward.1} parent=1 // pred_check_branch
      %806 = sbr.rel (0) target = $region17
    $region16: #{variant_coe_linear1d_forward.1} parent=1 // pred_region
      %808 = vsyncadd [#allocation5], 0
      %s809 = sshll.u32 [#allocation6], 4
      %s810 = int_to_ptr.vmem [resolvable:$true] %s809
      %s811 = sshll.u32 %s1, 4
      %s812 = int_to_ptr.hbm [resolvable:$true] %s811
      %817 = dma.vmem_to_hbm [thread:$0]  %s810, 256, %s812, [#allocation5], 32, 32, 2
    $region17: #{variant_coe_linear1d_forward.1} parent=1 // pred_fallthru
      _
    // Predicated region
    $region18: #{variant_coe_linear1d_forward.1} parent=1 // pred_check
      _
    $region19: #{variant_coe_linear1d_forward.1} parent=1 // pred_check_branch
      %819 = sbr.rel (0) target = $region21
    $region20: #{variant_coe_linear1d_forward.1} parent=1 // pred_region
      %821 = dma.done [#allocation5], 256
    $region21: #{variant_coe_linear1d_forward.1} parent=1 // pred_fallthru
      _
    %822 = vsyncpa [#allocation4], 1
    %823 = vsyncpa [#allocation5], 1

</llo_original>
